<compile_context>
chip_gen: v6e
topology: v6e:2x2x1
jax: 0.10.0
libtpu: 0.0.40
codegen_flags: <defaults>
</compile_context>

<pallas_src>
import functools

import jax
import jax.numpy as jnp
from jax.experimental import pallas as pl
from jax.experimental.pallas import tpu as pltpu


def _round_up(x, m):
    return ((x + m - 1) // m) * m


def _pick_tile(npad):
    for t in (512, 256, 128):
        if npad % t == 0:
            return t
    return 128


def _vmem_limit_bytes(*byte_counts):
    est = sum(byte_counts)
    # 2x margin + 4 MiB compiler-internal scratch; keep under v7x's 64 MiB
    # physical VMEM, never below the smallest scoped default.
    return int(max(16 << 20, min(2 * est + (4 << 20), 64 << 20)))


# ----------------------------- Pass 1: node vectors -------------------------

def _h_layers_kernel(alpha, dp, nv_hbm, w_ref, b_ref, g1_ref, g2_ref,
                     nv_s, cp_sem):
    """One grid step == one layer of the node-vector recurrence.

    nv_hbm : ANY/HBM (Np, 2Dp) f32   initial [nv1 | nv2] (read only at layer 0)
    w_ref  : VMEM (2Dp, 2Dp) bf16    block-diag(s*W1, s*W2), torch (out, in)
    b_ref  : VMEM (1, 2Dp)  f32      [b1 | b2]
    g1_ref : VMEM (Np, 2Dp) bf16 out [h1 | h2]
    g2_ref : VMEM (Np, 2Dp) bf16 out [h2 | -h1]
    nv_s   : VMEM (Np, 2Dp) f32 scratch, carried across layers
    """
    layer = pl.program_id(0)

    @pl.when(layer == 0)
    def _():
        cp = pltpu.make_async_copy(nv_hbm, nv_s, cp_sem)
        cp.start()
        cp.wait()

    x = nv_s[...]
    # x @ W^T without transposing W: contract the last dim of both operands.
    acc = jax.lax.dot_general(
        x.astype(jnp.bfloat16), w_ref[...],
        dimension_numbers=(((1,), (1,)), ((), ())),
        preferred_element_type=jnp.float32)
    h = jnp.tanh(alpha * (acc + b_ref[...]))          # f32 elementwise
    nv_s[...] = h                                     # carry to next layer

    hb = h.astype(jnp.bfloat16)
    g1_ref[...] = hb                                  # [h1 | h2]
    g2_ref[:, :dp] = hb[:, dp:]                       # h2
    g2_ref[:, dp:] = (-h[:, :dp]).astype(jnp.bfloat16)  # -h1 (negate in f32)


def _h_layers(nv_cat, wblk_bf16, bblk, *, alpha):
    L, two_dp, _ = wblk_bf16.shape
    npad = nv_cat.shape[0]
    dp = two_dp // 2
    kernel = functools.partial(_h_layers_kernel, float(alpha), dp)

    vmem = _vmem_limit_bytes(
        npad * two_dp * 4,          # nv carry scratch (f32)
        2 * two_dp * two_dp * 2,    # double-buffered block-diag weights (bf16)
        2 * two_dp * 4,             # double-buffered bias (f32)
        2 * 2 * npad * two_dp * 2,  # double-buffered g1 & g2 outputs (bf16)
    )
    # TODO(synk): for very large Np this pass should also be tiled over node
    # blocks; it is O(Np*Dp) memory so it scales far beyond the adjacency pass.
    return pl.pallas_call(
        kernel,
        out_shape=(jax.ShapeDtypeStruct((L, npad, two_dp), jnp.bfloat16),
                   jax.ShapeDtypeStruct((L, npad, two_dp), jnp.bfloat16)),
        grid_spec=pltpu.PrefetchScalarGridSpec(
            num_scalar_prefetch=0,
            grid=(L,),
            in_specs=[
                pl.BlockSpec(memory_space=pl.ANY),                          # nv_cat (HBM)
                pl.BlockSpec((None, two_dp, two_dp), lambda l: (l, 0, 0)),  # weights
                pl.BlockSpec((None, 1, two_dp), lambda l: (l, 0, 0)),       # bias
            ],
            out_specs=[
                pl.BlockSpec((None, npad, two_dp), lambda l: (l, 0, 0)),    # g1
                pl.BlockSpec((None, npad, two_dp), lambda l: (l, 0, 0)),    # g2
            ],
            scratch_shapes=[
                pltpu.VMEM((npad, two_dp), jnp.float32),  # node-vector carry
                pltpu.SemaphoreType.DMA,                  # layer-0 nv DMA
            ],
        ),
        compiler_params=pltpu.CompilerParams(
            dimension_semantics=("arbitrary",),           # sequential layer carry
            vmem_limit_bytes=vmem,
        ),
    )(nv_cat, wblk_bf16, bblk)


# ----------------------------- Pass 2: adjacency ----------------------------

def _adj_tile_kernel(alpha, g1_ref, g2_ref, r_ref):
    """One (layer, row-block, col-block) adjacency tile.

    tile = relu(alpha * ([h1_r | h2_r] @ [h2_c | -h1_c]^T))   (tanh deferred)
    """
    m = jax.lax.dot_general(
        g1_ref[...], g2_ref[...],
        dimension_numbers=(((1,), (1,)), ((), ())),
        preferred_element_type=jnp.float32)
    r_ref[...] = jax.nn.relu(alpha * m).astype(r_ref.dtype)


def _adj_layers(g1, g2, *, alpha):
    L, npad, two_dp = g1.shape
    tile = _pick_tile(npad)
    nblk = npad // tile
    kernel = functools.partial(_adj_tile_kernel, float(alpha))

    vmem = _vmem_limit_bytes(
        2 * tile * tile * 2,     # double-buffered output tile (bf16)
        2 * tile * two_dp * 2,   # double-buffered g1 row block (bf16)
        2 * tile * two_dp * 2,   # double-buffered g2 col block (bf16)
    )
    # TODO(synk): exploit antisymmetry at tile level (compute only r<=c tiles,
    # write tile(c,r) = -tile(r,c)^T) via a flattened triangular grid with
    # scalar-prefetched index tables; halves the adjacency MXU/VPU work.
    return pl.pallas_call(
        kernel,
        out_shape=jax.ShapeDtypeStruct((L, npad, npad), jnp.bfloat16),
        grid_spec=pltpu.PrefetchScalarGridSpec(
            num_scalar_prefetch=0,
            grid=(L, nblk, nblk),
            in_specs=[
                pl.BlockSpec((None, tile, two_dp), lambda l, r, c: (l, r, 0)),
                pl.BlockSpec((None, tile, two_dp), lambda l, r, c: (l, c, 0)),
            ],
            out_specs=pl.BlockSpec((None, tile, tile), lambda l, r, c: (l, r, c)),
        ),
        compiler_params=pltpu.CompilerParams(
            # No carried state on any axis -> fully parallel (megacore-shardable
            # across both TensorCores on v7x).
            dimension_semantics=("parallel", "parallel", "parallel"),
            vmem_limit_bytes=vmem,
        ),
    )(g1, g2)


# ----------------------------- Forward (jitted glue) ------------------------

@functools.partial(jax.jit, static_argnames=("alpha", "k"))
def _forward(idx, scale, emb1, emb2, wblk, bblk, *, alpha, k):
    n = idx.shape[0]
    L, two_dp, _ = wblk.shape
    dp = two_dp // 2
    dim = emb1.shape[1]
    npad = _round_up(max(n, 8), 128)

    # Embedding lookup + lane-dense zero padding.  Padded weight rows/cols and
    # bias entries are zero, so padded feature columns stay exactly 0.
    nv1 = jnp.pad(emb1[idx], ((0, npad - n), (0, dp - dim)))
    nv2 = jnp.pad(emb2[idx], ((0, npad - n), (0, dp - dim)))
    nv_cat = jnp.concatenate([nv1, nv2], axis=1)                  # (Np, 2Dp) f32

    # Fold the per-layer scale into the weights: (s*x)@W^T == x@(s*W)^T exactly.
    w_scaled = (wblk * scale[:, None, None]).astype(jnp.bfloat16)

    g1, g2 = _h_layers(nv_cat, w_scaled, bblk, alpha=alpha)
    r_all = _adj_layers(g1, g2, alpha=alpha)                      # (L, Np, Np) bf16

    # Deferred tanh: top-k on r = relu(alpha*a) picks the same indices as
    # top-k on adj0 = tanh(r); apply tanh only to the n*k selected values.
    r = r_all[:, :n, :n].astype(jnp.float32)
    # TODO(synk): for large n prefer jax.lax.approx_max_k on TPU.
    vals, t1 = jax.lax.top_k(r, k)                                # (L, n, k)
    li = jnp.arange(L)[:, None, None]
    ri = jnp.arange(n)[None, :, None]
    adj = jnp.zeros((L, n, n), jnp.float32).at[li, ri, t1].set(jnp.tanh(vals))
    return adj


class GraphConstructor:
    """JAX/Pallas port of MAGNN.graph_constructor (forward pass)."""

    def __init__(self, nnodes, k, dim, layer_num, alpha=3, seed=0):
        self.nnodes = nnodes
        self.layers = layer_num
        self.k = k
        self.dim = dim
        self.alpha = float(alpha)
        self.dim_pad = _round_up(dim, 128)
        dp = self.dim_pad

        key = jax.random.PRNGKey(seed)
        keys = jax.random.split(key, 2 + 4 * layer_num)
        # nn.Embedding default init: N(0, 1)
        self.emb1 = jax.random.normal(keys[0], (nnodes, dim), jnp.float32)
        self.emb2 = jax.random.normal(keys[1], (nnodes, dim), jnp.float32)

        # nn.Linear default init: U(-1/sqrt(in), 1/sqrt(in)); W is (out, in).
        bound = 1.0 / (dim ** 0.5)
        wblk, bblk = [], []
        for i in range(layer_num):
            k0, k1, k2, k3 = keys[2 + 4 * i: 6 + 4 * i]
            w1 = jax.random.uniform(k0, (dim, dim), jnp.float32, -bound, bound)
            b1 = jax.random.uniform(k1, (dim,), jnp.float32, -bound, bound)
            w2 = jax.random.uniform(k2, (dim, dim), jnp.float32, -bound, bound)
            b2 = jax.random.uniform(k3, (dim,), jnp.float32, -bound, bound)
            # Block-diagonal, zero-padded (2*Dp, 2*Dp) weight and (1, 2*Dp) bias.
            wb = jnp.zeros((2 * dp, 2 * dp), jnp.float32)
            wb = wb.at[:dim, :dim].set(w1)
            wb = wb.at[dp:dp + dim, dp:dp + dim].set(w2)
            bb = jnp.zeros((1, 2 * dp), jnp.float32)
            bb = bb.at[0, :dim].set(b1)
            bb = bb.at[0, dp:dp + dim].set(b2)
            wblk.append(wb)
            bblk.append(bb)
        self.wblk = jnp.stack(wblk)   # (L, 2Dp, 2Dp) f32; scale folded per call
        self.bblk = jnp.stack(bblk)   # (L, 1, 2Dp)  f32

    def __call__(self, idx, scale_idx, scale_set):
        scale = jnp.asarray(scale_set, jnp.float32)
        adj = _forward(jnp.asarray(idx, jnp.int32), scale, self.emb1, self.emb2,
                       self.wblk, self.bblk, alpha=self.alpha, k=self.k)
        return [adj[i] for i in range(self.layers)]


if __name__ == "__main__":
    nnodes, k, dim, layer_num = 16, 4, 32, 2

    gc = GraphConstructor(nnodes=nnodes, k=k, dim=dim, layer_num=layer_num,
                          alpha=3, seed=0)

    idx = jnp.arange(nnodes, dtype=jnp.int32)
    scale_idx = jnp.arange(layer_num, dtype=jnp.int32)  # unused in forward
    scale_set = [1.0, 0.8]

    adj_set = gc(idx, scale_idx, scale_set)
    for adj in adj_set:
        jax.block_until_ready(adj)
        assert adj.shape == (nnodes, nnodes)
        assert adj.dtype == jnp.float32
        # top-k mask keeps at most k nonzeros per row.
        assert int(jnp.max(jnp.sum(adj > 0, axis=1))) <= k

    print("KERNEL_OK")
</pallas_src>

<mosaic_0001>
module attributes {stable_mosaic.version = 11 : i64} {
  func.func @_adj_tile_kernel(%arg0: i32, %arg1: i32, %arg2: i32, %arg3: memref<1x128x256xbf16, #tpu.memory_space<vmem>>, %arg4: memref<1x128x256xbf16, #tpu.memory_space<vmem>>, %arg5: memref<1x128x128xbf16, #tpu.memory_space<vmem>>) attributes {dimension_semantics = [#tpu.dimension_semantics<parallel>, #tpu.dimension_semantics<parallel>, #tpu.dimension_semantics<parallel>], iteration_bounds = array<i64: 2, 1, 1>, scalar_prefetch = 0 : i64, scratch_operands = 0 : i64, tpu.core_type = #tpu.core_type<tc>, window_params = [{transform_indices = @transform_0, window_bounds = array<i64: 1, 128, 256>}, {transform_indices = @transform_1, window_bounds = array<i64: 1, 128, 256>}, {transform_indices = @transform_2, window_bounds = array<i64: 1, 128, 128>}]} {
    %c0 = arith.constant 0 : index
    %c0_0 = arith.constant 0 : index
    %c0_1 = arith.constant 0 : index
    %0 = vector.load %arg3[%c0, %c0_0, %c0_1] : memref<1x128x256xbf16, #tpu.memory_space<vmem>>, vector<1x128x256xbf16>
    %1 = vector.shape_cast %0 : vector<1x128x256xbf16> to vector<128x256xbf16>
    %c0_2 = arith.constant 0 : index
    %c0_3 = arith.constant 0 : index
    %c0_4 = arith.constant 0 : index
    %2 = vector.load %arg4[%c0_2, %c0_3, %c0_4] : memref<1x128x256xbf16, #tpu.memory_space<vmem>>, vector<1x128x256xbf16>
    %3 = vector.shape_cast %2 : vector<1x128x256xbf16> to vector<128x256xbf16>
    %cst = arith.constant dense<0.000000e+00> : vector<128x128xf32>
    %4 = tpu.matmul %1, %3, %cst {dimension_numbers = #tpu.dot_dimension_numbers<[1], [1], [0], [0], [0, 0, 1, 0], [], []>} : vector<128x256xbf16>, vector<128x256xbf16>, vector<128x128xf32> -> vector<128x128xf32>
    %cst_5 = arith.constant 3.000000e+00 : f32
    %5 = vector.broadcast %cst_5 : f32 to vector<128x128xf32>
    %6 = arith.mulf %5, %4 : vector<128x128xf32>
    %cst_6 = arith.constant 0.000000e+00 : f32
    %7 = vector.broadcast %cst_6 : f32 to vector<128x128xf32>
    %8 = arith.maximumf %6, %7 : vector<128x128xf32>
    %9 = arith.truncf %8 : vector<128x128xf32> to vector<128x128xbf16>
    %c0_7 = arith.constant 0 : index
    %c0_8 = arith.constant 0 : index
    %c0_9 = arith.constant 0 : index
    %10 = vector.load %arg5[%c0_7, %c0_8, %c0_9] : memref<1x128x128xbf16, #tpu.memory_space<vmem>>, vector<1x128x128xbf16>
    %11 = vector.shape_cast %10 : vector<1x128x128xbf16> to vector<128x128xbf16>
    %12 = vector.shape_cast %9 : vector<128x128xbf16> to vector<1x128x128xbf16>
    tpu.vector_store %arg5[%c0_7, %c0_8, %c0_9], %12 {strides = array<i32>} : memref<1x128x128xbf16, #tpu.memory_space<vmem>>, vector<1x128x128xbf16>,
    return
  }
  func.func @transform_0(%arg0: i32, %arg1: i32, %arg2: i32) -> (i32, i32, i32) {
    %c0_i32 = arith.constant 0 : i32
    %c0_i32_0 = arith.constant 0 : i32
    return %arg0, %arg1, %c0_i32 : i32, i32, i32
  }
  func.func @transform_1(%arg0: i32, %arg1: i32, %arg2: i32) -> (i32, i32, i32) {
    %c0_i32 = arith.constant 0 : i32
    %c0_i32_0 = arith.constant 0 : i32
    return %arg0, %arg2, %c0_i32 : i32, i32, i32
  }
  func.func @transform_2(%arg0: i32, %arg1: i32, %arg2: i32) -> (i32, i32, i32) {
    %c0_i32 = arith.constant 0 : i32
    return %arg0, %arg1, %arg2 : i32, i32, i32
  }
}

module attributes {stable_mosaic.version = 11 : i64} {
  func.func @_h_layers_kernel(%arg0: i32, %arg1: memref<128x256xf32, #tpu.memory_space<any>>, %arg2: memref<1x256x256xbf16, #tpu.memory_space<vmem>>, %arg3: memref<1x1x256xf32, #tpu.memory_space<vmem>>, %arg4: memref<1x128x256xbf16, #tpu.memory_space<vmem>>, %arg5: memref<1x128x256xbf16, #tpu.memory_space<vmem>>, %arg6: memref<128x256xf32, #tpu.memory_space<vmem>>, %arg7: memref<!tpu.dma_semaphore, #tpu.memory_space<semaphore_mem>>) attributes {dimension_semantics = [#tpu.dimension_semantics<arbitrary>], iteration_bounds = array<i64: 2>, scalar_prefetch = 0 : i64, scratch_operands = 2 : i64, tpu.core_type = #tpu.core_type<tc>, window_params = [{}, {transform_indices = @transform_1, window_bounds = array<i64: 1, 256, 256>}, {transform_indices = @transform_2, window_bounds = array<i64: 1, 1, 256>}, {transform_indices = @transform_3, window_bounds = array<i64: 1, 128, 256>}, {transform_indices = @transform_4, window_bounds = array<i64: 1, 128, 256>}]} {
    %c0_i32 = arith.constant 0 : i32
    %0 = arith.cmpi eq, %arg0, %c0_i32 : i32
    %1 = arith.extui %0 : i1 to i32
    %c0_i32_0 = arith.constant 0 : i32
    %2 = arith.cmpi ne, %1, %c0_i32_0 : i32
    scf.if %2 {
      tpu.enqueue_dma source(%arg1 : memref<128x256xf32, #tpu.memory_space<any>>) target(%arg6 : memref<128x256xf32, #tpu.memory_space<vmem>>) target_semaphore(%arg7 : memref<!tpu.dma_semaphore, #tpu.memory_space<semaphore_mem>>)
      tpu.wait_dma2 semaphore(%arg7 : memref<!tpu.dma_semaphore, #tpu.memory_space<semaphore_mem>>) src(%arg1 : memref<128x256xf32, #tpu.memory_space<any>>) dst(%arg6 : memref<128x256xf32, #tpu.memory_space<vmem>>)
    } else {
    }
    %c0 = arith.constant 0 : index
    %c0_1 = arith.constant 0 : index
    %3 = vector.load %arg6[%c0, %c0_1] : memref<128x256xf32, #tpu.memory_space<vmem>>, vector<128x256xf32>
    %4 = arith.truncf %3 : vector<128x256xf32> to vector<128x256xbf16>
    %c0_2 = arith.constant 0 : index
    %c0_3 = arith.constant 0 : index
    %c0_4 = arith.constant 0 : index
    %5 = vector.load %arg2[%c0_2, %c0_3, %c0_4] : memref<1x256x256xbf16, #tpu.memory_space<vmem>>, vector<1x256x256xbf16>
    %6 = vector.shape_cast %5 : vector<1x256x256xbf16> to vector<256x256xbf16>
    %cst = arith.constant dense<0.000000e+00> : vector<128x256xf32>
    %7 = tpu.matmul %4, %6, %cst {dimension_numbers = #tpu.dot_dimension_numbers<[1], [1], [0], [0], [0, 0, 1, 0], [], []>} : vector<128x256xbf16>, vector<256x256xbf16>, vector<128x256xf32> -> vector<128x256xf32>
    %c0_5 = arith.constant 0 : index
    %c0_6 = arith.constant 0 : index
    %c0_7 = arith.constant 0 : index
    %8 = vector.load %arg3[%c0_5, %c0_6, %c0_7] : memref<1x1x256xf32, #tpu.memory_space<vmem>>, vector<1x1x256xf32>
    %9 = vector.shape_cast %8 : vector<1x1x256xf32> to vector<1x256xf32>
    %10 = vector.broadcast %9 : vector<1x256xf32> to vector<128x256xf32>
    %11 = arith.addf %7, %10 : vector<128x256xf32>
    %cst_8 = arith.constant 3.000000e+00 : f32
    %12 = vector.broadcast %cst_8 : f32 to vector<128x256xf32>
    %13 = arith.mulf %12, %11 : vector<128x256xf32>
    %14 = math.tanh %13 : vector<128x256xf32>
    %c0_9 = arith.constant 0 : index
    %c0_10 = arith.constant 0 : index
    %15 = vector.load %arg6[%c0_9, %c0_10] : memref<128x256xf32, #tpu.memory_space<vmem>>, vector<128x256xf32>
    tpu.vector_store %arg6[%c0_9, %c0_10], %14 {strides = array<i32>} : memref<128x256xf32, #tpu.memory_space<vmem>>, vector<128x256xf32>,
    %16 = arith.truncf %14 : vector<128x256xf32> to vector<128x256xbf16>
    %c0_11 = arith.constant 0 : index
    %c0_12 = arith.constant 0 : index
    %c0_13 = arith.constant 0 : index
    %17 = vector.load %arg4[%c0_11, %c0_12, %c0_13] : memref<1x128x256xbf16, #tpu.memory_space<vmem>>, vector<1x128x256xbf16>
    %18 = vector.shape_cast %17 : vector<1x128x256xbf16> to vector<128x256xbf16>
    %19 = vector.shape_cast %16 : vector<128x256xbf16> to vector<1x128x256xbf16>
    tpu.vector_store %arg4[%c0_11, %c0_12, %c0_13], %19 {strides = array<i32>} : memref<1x128x256xbf16, #tpu.memory_space<vmem>>, vector<1x128x256xbf16>,
    %20 = vector.extract_strided_slice %16 {offsets = [0, 128], sizes = [128, 128], strides = [1, 1]} : vector<128x256xbf16> to vector<128x128xbf16>
    %c0_14 = arith.constant 0 : index
    %c0_15 = arith.constant 0 : index
    %c0_16 = arith.constant 0 : index
    %21 = vector.load %arg5[%c0_14, %c0_15, %c0_16] : memref<1x128x256xbf16, #tpu.memory_space<vmem>>, vector<1x128x128xbf16>
    %22 = vector.shape_cast %21 : vector<1x128x128xbf16> to vector<128x128xbf16>
    %23 = vector.shape_cast %20 : vector<128x128xbf16> to vector<1x128x128xbf16>
    tpu.vector_store %arg5[%c0_14, %c0_15, %c0_16], %23 {strides = array<i32>} : memref<1x128x256xbf16, #tpu.memory_space<vmem>>, vector<1x128x128xbf16>,
    %24 = vector.extract_strided_slice %14 {offsets = [0, 0], sizes = [128, 128], strides = [1, 1]} : vector<128x256xf32> to vector<128x128xf32>
    %cst_17 = arith.constant 0.000000e+00 : f32
    %25 = vector.broadcast %cst_17 : f32 to vector<128x128xf32>
    %26 = arith.subf %25, %24 : vector<128x128xf32>
    %27 = arith.truncf %26 : vector<128x128xf32> to vector<128x128xbf16>
    %c0_18 = arith.constant 0 : index
    %c0_19 = arith.constant 0 : index
    %c128 = arith.constant 128 : index
    %28 = vector.load %arg5[%c0_18, %c0_19, %c128] : memref<1x128x256xbf16, #tpu.memory_space<vmem>>, vector<1x128x128xbf16>
    %29 = vector.shape_cast %28 : vector<1x128x128xbf16> to vector<128x128xbf16>
    %30 = vector.shape_cast %27 : vector<128x128xbf16> to vector<1x128x128xbf16>
    tpu.vector_store %arg5[%c0_18, %c0_19, %c128], %30 {strides = array<i32>} : memref<1x128x256xbf16, #tpu.memory_space<vmem>>, vector<1x128x128xbf16>,
    return
  }
  func.func @transform_1(%arg0: i32) -> (i32, i32, i32) {
    %c0_i32 = arith.constant 0 : i32
    %c0_i32_0 = arith.constant 0 : i32
    %c0_i32_1 = arith.constant 0 : i32
    return %arg0, %c0_i32, %c0_i32_0 : i32, i32, i32
  }
  func.func @transform_2(%arg0: i32) -> (i32, i32, i32) {
    %c0_i32 = arith.constant 0 : i32
    %c0_i32_0 = arith.constant 0 : i32
    %c0_i32_1 = arith.constant 0 : i32
    return %arg0, %c0_i32, %c0_i32_0 : i32, i32, i32
  }
  func.func @transform_3(%arg0: i32) -> (i32, i32, i32) {
    %c0_i32 = arith.constant 0 : i32
    %c0_i32_0 = arith.constant 0 : i32
    %c0_i32_1 = arith.constant 0 : i32
    return %arg0, %c0_i32, %c0_i32_0 : i32, i32, i32
  }
  func.func @transform_4(%arg0: i32) -> (i32, i32, i32) {
    %c0_i32 = arith.constant 0 : i32
    %c0_i32_0 = arith.constant 0 : i32
    %c0_i32_1 = arith.constant 0 : i32
    return %arg0, %c0_i32, %c0_i32_0 : i32, i32, i32
  }
}

</mosaic_0001>

<llo_original>
// kernel: _forward.3
$region0: #{_forward.3}
  #allocation0 [shape = 'u32[]', space=smem, size = 0x4, offset = 0x4, fixed_abs, tag = 'smem constant byte address 0x4 - core index']
  #allocation1 [shape = 'u32[144,128]{1,0:T(1,128)}', space=vmem, size = 0x12000, scoped, tag = 'internal scratch']
  %s0 = inlined_call_operand.vmem [shape: bf16[2,128,256], index: 0, kind: input, shape index: {}]
  %s1 = inlined_call_operand.vmem [shape: bf16[2,128,256], index: 1, kind: input, shape index: {}]
  %s2 = inlined_call_operand.vmem [shape: bf16[2,128,128], index: 2, kind: output, shape index: {}]
  %s3 = sld [smem:[#allocation0]]
  $region41: #{_forward.3} parent=0
    _
  %s5 = ssub.s32 1, %s3
  %s6 = scalar_select 0, %s5, %s3
  loop: start=0, step=1, limit=4
  $region2: #{_forward.3} parent=0 // loop_pre_header
    _
  $region3: #{_forward.3} parent=0 // loop_header
    %s8 = sphi 0, %s12
    %p9 = scmp.ge.s32.totalorder %s8, 4
    %s15 = sphi 0, %s34
    %s16 = sphi 0, %s30
    %s17 = sphi 0, %s26
    %s18 = sphi 0, %s15
    %s19 = sphi 0, %s16
    %s20 = sphi 0, %s17
    %s21 = sphi 0, %s18
    %s22 = sphi 0, %s19
    %s23 = sphi 0, %s20
    %s39 = sphi 0, %s41
    %s42 = sphi 0, %s39
    %s43 = sphi 0, %s42
    %s59 = sphi 0, %s43
    %s67 = sphi 0, %s69
    %s70 = sphi 0, %s67
    %s71 = sphi 0, %s70
    %s87 = sphi 0, %s71
    %s97 = sphi 0, %s99
    %s100 = sphi 0, %s97
    %s101 = sphi 0, %s100
    %s117 = sphi 0, %s101
  $region4: #{_forward.3} parent=0 // loop_header_branch
    %11 = sbr.rel (%p9) target = $region8
  $region5: #{_forward.3} parent=0 // loop_body
    %s13 = ssub.s32 %s8, 1
    %s14 = ssub.s32 %s8, 2
    %s24 = sadd.s32 1, %s17
    %p25 = scmp.ge.s32.totalorder %s24, 1
    %s26 = scalar_select %p25, 0, %s24
    %s27 = sadd.s32 1, %s16
    %s28 = scalar_select %p25, %s27, %s16
    %p29 = scmp.ge.s32.totalorder %s28, 1
    %s30 = scalar_select %p29, 0, %s28
    %s31 = sadd.s32 1, %s15
    %s32 = scalar_select %p29, %s31, %s15
    %p33 = scmp.ge.s32.totalorder %s32, 2
    %s34 = scalar_select %p33, 0, %s32
    %s35 = ssub.s32 %s15, %s34
    %s36 = ssub.s32 %s16, %s30
    %s37 = sor.u32 %s35, %s36
    %p38 = scmp.eq.s32.totalorder %s37, 0
    %s40 = sadd.s32 %s39, 1
    %s41 = scalar_select %p38, %s39, %s40
    %p44 = pneg %p38
    %p45 = scmp.eq.s32.totalorder %s8, 1
    %p46 = por %p44, %p45
    %p47 = scmp.ne.s32.totalorder %s39, %s42
    %p48 = scmp.eq.s32.totalorder %s8, 0
    %p49 = por %p47, %p48
    %p50 = scmp.ne.s32.totalorder %s39, %s42
    %p51 = scmp.eq.s32.totalorder %s13, 1
    %p52 = por %p50, %p51
    %p53 = scmp.ne.s32.totalorder %s42, %s43
    %p54 = scmp.eq.s32.totalorder %s13, 0
    %p55 = por %p53, %p54
    %p56 = scmp.ne.s32.totalorder %s42, %s43
    %p57 = scmp.eq.s32.totalorder %s14, 1
    %p58 = por %p56, %p57
    %p60 = scmp.ne.s32.totalorder %s43, %s59
    %p61 = scmp.eq.s32.totalorder %s14, 0
    %p62 = por %p60, %p61
    %s63 = ssub.s32 %s15, %s34
    %s64 = ssub.s32 %s17, %s26
    %s65 = sor.u32 %s63, %s64
    %p66 = scmp.eq.s32.totalorder %s65, 0
    %s68 = sadd.s32 %s67, 1
    %s69 = scalar_select %p66, %s67, %s68
    %p72 = pneg %p66
    %p73 = scmp.eq.s32.totalorder %s8, 1
    %p74 = por %p72, %p73
    %p75 = scmp.ne.s32.totalorder %s67, %s70
    %p76 = scmp.eq.s32.totalorder %s8, 0
    %p77 = por %p75, %p76
    %p78 = scmp.ne.s32.totalorder %s67, %s70
    %p79 = scmp.eq.s32.totalorder %s13, 1
    %p80 = por %p78, %p79
    %p81 = scmp.ne.s32.totalorder %s70, %s71
    %p82 = scmp.eq.s32.totalorder %s13, 0
    %p83 = por %p81, %p82
    %p84 = scmp.ne.s32.totalorder %s70, %s71
    %p85 = scmp.eq.s32.totalorder %s14, 1
    %p86 = por %p84, %p85
    %p88 = scmp.ne.s32.totalorder %s71, %s87
    %p89 = scmp.eq.s32.totalorder %s14, 0
    %p90 = por %p88, %p89
    %s91 = ssub.s32 %s15, %s34
    %s92 = ssub.s32 %s16, %s30
    %s93 = sor.u32 %s91, %s92
    %s94 = ssub.s32 %s17, %s26
    %s95 = sor.u32 %s93, %s94
    %p96 = scmp.eq.s32.totalorder %s95, 0
    %s98 = sadd.s32 %s97, 1
    %s99 = scalar_select %p96, %s97, %s98
    %p102 = pneg %p96
    %p103 = scmp.eq.s32.totalorder %s8, 1
    %p104 = por %p102, %p103
    %p105 = scmp.ne.s32.totalorder %s97, %s100
    %p106 = scmp.eq.s32.totalorder %s8, 0
    %p107 = por %p105, %p106
    %p108 = scmp.ne.s32.totalorder %s97, %s100
    %p109 = scmp.eq.s32.totalorder %s13, 1
    %p110 = por %p108, %p109
    %p111 = scmp.ne.s32.totalorder %s100, %s101
    %p112 = scmp.eq.s32.totalorder %s13, 0
    %p113 = por %p111, %p112
    %p114 = scmp.ne.s32.totalorder %s100, %s101
    %p115 = scmp.eq.s32.totalorder %s14, 1
    %p116 = por %p114, %p115
    %p118 = scmp.ne.s32.totalorder %s101, %s117
    %p119 = scmp.eq.s32.totalorder %s14, 0
    %p120 = por %p118, %p119
    %p121 = scmp.le.s32.totalorder 1, %s8
    %p122 = scmp.lt.s32.totalorder %s8, 3
    %p123 = pnand %p121, %p122
    %p124 = pneg %p123
    // Predicated region
    $region9: #{_forward.3} parent=5 // pred_check
      _
    $region10: #{_forward.3} parent=5 // pred_check_branch
      %126 = sbr.rel (%p123) target = $region12
    $region11: #{_forward.3} parent=5 // pred_region
      %s127 = ssub.s32 %s8, 1
    $region12: #{_forward.3} parent=5 // pred_fallthru
      _
    %p128 = scmp.lt.s32.totalorder %s8, 2
    // Predicated region
    $region13: #{_forward.3} parent=5 // pred_check
      %p129 = pneg %p128
    $region14: #{_forward.3} parent=5 // pred_check_branch
      %131 = sbr.rel (%p129) target = $region16
    $region15: #{_forward.3} parent=5 // pred_region
      // Predicated region
      $region17: #{_forward.3} parent=15 // pred_check
        %p132 = pneg %p49
      $region18: #{_forward.3} parent=15 // pred_check_branch
        %134 = sbr.rel (%p132) target = $region20
      $region19: #{_forward.3} parent=15 // pred_region
        %s135 = smul.u32 16, %s16
        %p136 = scmp.lt.s32.totalorder %s15, 1
        %s137 = scalar_select %p136, %s15, 1
        %p138 = scmp.lt.s32.totalorder %s135, 15
        %s139 = scalar_select %p138, %s135, 15
        %s140 = smul.addr %s139, 2
        %s141 = smul.addr %s137, 32
        %s142 = sadd.s32 %s140, %s141
        %s143 = smul.addr %s142, 4
        %s144 = scalar_lea.vmem %s0, %s143
        %s145 = smul.u32 16, %s16
      $region20: #{_forward.3} parent=15 // pred_fallthru
        _
      // Predicated region
      $region21: #{_forward.3} parent=15 // pred_check
        %p146 = pneg %p77
      $region22: #{_forward.3} parent=15 // pred_check_branch
        %148 = sbr.rel (%p146) target = $region24
      $region23: #{_forward.3} parent=15 // pred_region
        %s149 = smul.u32 16, %s17
        %p150 = scmp.lt.s32.totalorder %s15, 1
        %s151 = scalar_select %p150, %s15, 1
        %p152 = scmp.lt.s32.totalorder %s149, 15
        %s153 = scalar_select %p152, %s149, 15
        %s154 = smul.addr %s153, 2
        %s155 = smul.addr %s151, 32
        %s156 = sadd.s32 %s154, %s155
        %s157 = smul.addr %s156, 4
        %s158 = scalar_lea.vmem %s1, %s157
        %s159 = smul.u32 16, %s17
      $region24: #{_forward.3} parent=15 // pred_fallthru
        _
    $region16: #{_forward.3} parent=5 // pred_fallthru
      _
    %p160 = scmp.le.s32.totalorder 1, %s8
    %p161 = scmp.lt.s32.totalorder %s8, 3
    %p162 = pnand %p160, %p161
    %p163 = pneg %p162
    // Predicated region
    $region25: #{_forward.3} parent=5 // pred_check
      _
    $region26: #{_forward.3} parent=5 // pred_check_branch
      %165 = sbr.rel (%p162) target = $region28
    $region27: #{_forward.3} parent=5 // pred_region
      %s166 = ssub.s32 %s8, 1
      %s167 = smul.u32 16, %s19
      %p168 = scmp.lt.s32.totalorder %s18, 1
      %s169 = scalar_select %p168, %s18, 1
      %p170 = scmp.lt.s32.totalorder %s167, 15
      %s171 = scalar_select %p170, %s167, 15
      %s172 = smul.addr %s171, 2
      %s173 = smul.addr %s169, 32
      %s174 = sadd.s32 %s172, %s173
      %s175 = smul.addr %s174, 4
      %s176 = scalar_lea.vmem %s0, %s175
      %p177 = pneg %p55
      %p178 = pneg %p52
      %s179 = smul.u32 16, %s20
      %p180 = scmp.lt.s32.totalorder %s18, 1
      %s181 = scalar_select %p180, %s18, 1
      %p182 = scmp.lt.s32.totalorder %s179, 15
      %s183 = scalar_select %p182, %s179, 15
      %s184 = smul.addr %s183, 2
      %s185 = smul.addr %s181, 32
      %s186 = sadd.s32 %s184, %s185
      %s187 = smul.addr %s186, 4
      %s188 = scalar_lea.vmem %s1, %s187
      %p189 = pneg %p83
      %p190 = pneg %p80
      %p191 = pneg %p113
      %p192 = pneg %p110
      %s193 = smul.u32 16, %s19
      %p194 = scmp.lt.s32.totalorder %s18, 1
      %s195 = scalar_select %p194, %s18, 1
      %p196 = scmp.lt.s32.totalorder %s193, 15
      %s197 = scalar_select %p196, %s193, 15
      %p198 = scmp.lt.s32.totalorder %s20, 0
      %s199 = scalar_select %p198, %s20, 0
      %s200 = sadd.s32 %s199, %s197
      %s201 = smul.addr %s195, 16
      %s202 = sadd.s32 %s200, %s201
      %s203 = smul.addr %s202, 4
      %s204 = scalar_lea.vmem %s2, %s203
      %s205 = smul.u32 16, %s19
      %p206 = scmp.lt.s32.totalorder %s18, 1
      %s207 = scalar_select %p206, %s18, 1
      %p208 = scmp.lt.s32.totalorder %s205, 15
      %s209 = scalar_select %p208, %s205, 15
      %s210 = smul.addr %s209, 2
      %s211 = smul.addr %s207, 32
      %s212 = sadd.s32 %s210, %s211
      %s213 = smul.addr %s212, 4
      %s214 = scalar_lea.vmem %s0, %s213
      %s215 = smul.u32 16, %s19
      %s216 = smul.u32 16, %s20
      %p217 = scmp.lt.s32.totalorder %s18, 1
      %s218 = scalar_select %p217, %s18, 1
      %p219 = scmp.lt.s32.totalorder %s216, 15
      %s220 = scalar_select %p219, %s216, 15
      %s221 = smul.addr %s220, 2
      %s222 = smul.addr %s218, 32
      %s223 = sadd.s32 %s221, %s222
      %s224 = smul.addr %s223, 4
      %s225 = scalar_lea.vmem %s1, %s224
      %s226 = smul.u32 16, %s20
      %s227 = smul.u32 16, %s19
      %p228 = scmp.lt.s32.totalorder %s18, 1
      %s229 = scalar_select %p228, %s18, 1
      %p230 = scmp.lt.s32.totalorder %s227, 15
      %s231 = scalar_select %p230, %s227, 15
      %p232 = scmp.lt.s32.totalorder %s20, 0
      %s233 = scalar_select %p232, %s20, 0
      %s234 = sadd.s32 %s233, %s231
      %s235 = smul.addr %s229, 16
      %s236 = sadd.s32 %s234, %s235
      %s237 = smul.addr %s236, 4
      %s238 = scalar_lea.vmem %s2, %s237
      %s239 = smul.u32 16, %s19
      %v241 = vld [vmem:[%s214] sm:$0xff]
      %v242 = vld [vmem:[%s214 + $0x8] sm:$0xff]
      %v243 = vld [vmem:[%s214 + $0x10] sm:$0xff]
      %v244 = vld [vmem:[%s214 + $0x18] sm:$0xff]
      %v245 = vld [vmem:[%s214 + $0x20] sm:$0xff]
      %v246 = vld [vmem:[%s214 + $0x28] sm:$0xff]
      %v247 = vld [vmem:[%s214 + $0x30] sm:$0xff]
      %v248 = vld [vmem:[%s214 + $0x38] sm:$0xff]
      %v249 = vld [vmem:[%s214 + $0x40] sm:$0xff]
      %v250 = vld [vmem:[%s214 + $0x48] sm:$0xff]
      %v251 = vld [vmem:[%s214 + $0x50] sm:$0xff]
      %v252 = vld [vmem:[%s214 + $0x58] sm:$0xff]
      %v253 = vld [vmem:[%s214 + $0x60] sm:$0xff]
      %v254 = vld [vmem:[%s214 + $0x68] sm:$0xff]
      %v255 = vld [vmem:[%s214 + $0x70] sm:$0xff]
      %v256 = vld [vmem:[%s214 + $0x78] sm:$0xff]
      %v257 = vld [vmem:[%s225] sm:$0xff]
      %v258 = vld [vmem:[%s225 + $0x8] sm:$0xff]
      %v259 = vld [vmem:[%s225 + $0x10] sm:$0xff]
      %v260 = vld [vmem:[%s225 + $0x18] sm:$0xff]
      %v261 = vld [vmem:[%s225 + $0x20] sm:$0xff]
      %v262 = vld [vmem:[%s225 + $0x28] sm:$0xff]
      %v263 = vld [vmem:[%s225 + $0x30] sm:$0xff]
      %v264 = vld [vmem:[%s225 + $0x38] sm:$0xff]
      %v265 = vld [vmem:[%s225 + $0x40] sm:$0xff]
      %v266 = vld [vmem:[%s225 + $0x48] sm:$0xff]
      %v267 = vld [vmem:[%s225 + $0x50] sm:$0xff]
      %v268 = vld [vmem:[%s225 + $0x58] sm:$0xff]
      %v269 = vld [vmem:[%s225 + $0x60] sm:$0xff]
      %v270 = vld [vmem:[%s225 + $0x68] sm:$0xff]
      %v271 = vld [vmem:[%s225 + $0x70] sm:$0xff]
      %v272 = vld [vmem:[%s225 + $0x78] sm:$0xff]
      %v289 = vunpack.c.l.b16 %v241
      %v290 = vunpack.c.h.b16 %v241
      %v291 = vunpack.c.l.b16 %v242
      %v292 = vunpack.c.h.b16 %v242
      %v293 = vunpack.c.l.b16 %v243
      %v294 = vunpack.c.h.b16 %v243
      %v295 = vunpack.c.l.b16 %v244
      %v296 = vunpack.c.h.b16 %v244
      %v297 = vunpack.c.l.b16 %v245
      %v298 = vunpack.c.h.b16 %v245
      %v299 = vunpack.c.l.b16 %v246
      %v300 = vunpack.c.h.b16 %v246
      %v301 = vunpack.c.l.b16 %v247
      %v302 = vunpack.c.h.b16 %v247
      %v303 = vunpack.c.l.b16 %v248
      %v304 = vunpack.c.h.b16 %v248
      %v305 = vunpack.c.l.b16 %v249
      %v306 = vunpack.c.h.b16 %v249
      %v307 = vunpack.c.l.b16 %v250
      %v308 = vunpack.c.h.b16 %v250
      %v309 = vunpack.c.l.b16 %v251
      %v310 = vunpack.c.h.b16 %v251
      %v311 = vunpack.c.l.b16 %v252
      %v312 = vunpack.c.h.b16 %v252
      %v313 = vunpack.c.l.b16 %v253
      %v314 = vunpack.c.h.b16 %v253
      %v315 = vunpack.c.l.b16 %v254
      %v316 = vunpack.c.h.b16 %v254
      %v317 = vunpack.c.l.b16 %v255
      %v318 = vunpack.c.h.b16 %v255
      %v319 = vunpack.c.l.b16 %v256
      %v320 = vunpack.c.h.b16 %v256
      %v321 = vpack.c.b16 %v291, %v289
      %v322 = vpack.c.b16 %v292, %v290
      %v323 = vpack.c.b16 %v295, %v293
      %v324 = vpack.c.b16 %v296, %v294
      %v325 = vpack.c.b16 %v299, %v297
      %v326 = vpack.c.b16 %v300, %v298
      %v327 = vpack.c.b16 %v303, %v301
      %v328 = vpack.c.b16 %v304, %v302
      %v329 = vpack.c.b16 %v307, %v305
      %v330 = vpack.c.b16 %v308, %v306
      %v331 = vpack.c.b16 %v311, %v309
      %v332 = vpack.c.b16 %v312, %v310
      %v333 = vpack.c.b16 %v315, %v313
      %v334 = vpack.c.b16 %v316, %v314
      %v335 = vpack.c.b16 %v319, %v317
      %v336 = vpack.c.b16 %v320, %v318
      %v369 = vunpack.c.l.b16 %v257
      %v370 = vunpack.c.h.b16 %v257
      %v371 = vunpack.c.l.b16 %v258
      %v372 = vunpack.c.h.b16 %v258
      %v373 = vunpack.c.l.b16 %v259
      %v374 = vunpack.c.h.b16 %v259
      %v375 = vunpack.c.l.b16 %v260
      %v376 = vunpack.c.h.b16 %v260
      %v377 = vunpack.c.l.b16 %v261
      %v378 = vunpack.c.h.b16 %v261
      %v379 = vunpack.c.l.b16 %v262
      %v380 = vunpack.c.h.b16 %v262
      %v381 = vunpack.c.l.b16 %v263
      %v382 = vunpack.c.h.b16 %v263
      %v383 = vunpack.c.l.b16 %v264
      %v384 = vunpack.c.h.b16 %v264
      %v385 = vunpack.c.l.b16 %v265
      %v386 = vunpack.c.h.b16 %v265
      %v387 = vunpack.c.l.b16 %v266
      %v388 = vunpack.c.h.b16 %v266
      %v389 = vunpack.c.l.b16 %v267
      %v390 = vunpack.c.h.b16 %v267
      %v391 = vunpack.c.l.b16 %v268
      %v392 = vunpack.c.h.b16 %v268
      %v393 = vunpack.c.l.b16 %v269
      %v394 = vunpack.c.h.b16 %v269
      %v395 = vunpack.c.l.b16 %v270
      %v396 = vunpack.c.h.b16 %v270
      %v397 = vunpack.c.l.b16 %v271
      %v398 = vunpack.c.h.b16 %v271
      %v399 = vunpack.c.l.b16 %v272
      %v400 = vunpack.c.h.b16 %v272
      %v401 = vpack.c.b16 %v371, %v369
      %v402 = vpack.c.b16 %v372, %v370
      %v403 = vpack.c.b16 %v375, %v373
      %v404 = vpack.c.b16 %v376, %v374
      %v405 = vpack.c.b16 %v379, %v377
      %v406 = vpack.c.b16 %v380, %v378
      %v407 = vpack.c.b16 %v383, %v381
      %v408 = vpack.c.b16 %v384, %v382
      %v409 = vpack.c.b16 %v387, %v385
      %v410 = vpack.c.b16 %v388, %v386
      %v411 = vpack.c.b16 %v391, %v389
      %v412 = vpack.c.b16 %v392, %v390
      %v413 = vpack.c.b16 %v395, %v393
      %v414 = vpack.c.b16 %v396, %v394
      %v415 = vpack.c.b16 %v399, %v397
      %v416 = vpack.c.b16 %v400, %v398
      %433 = vmatprep.subr.bf16.mxu0 %v416
      %434 = vmatpush1.bf16.xpose.msra.mxu0 %v415
      %435 = vmatprep.subr.bf16.mxu0 %v414
      %436 = vmatpush1.bf16.xpose.msra.mxu0 %v413
      %437 = vmatprep.subr.bf16.mxu0 %v412
      %438 = vmatpush1.bf16.xpose.msra.mxu0 %v411
      %439 = vmatprep.subr.bf16.mxu0 %v410
      %440 = vmatpush1.bf16.xpose.msra.mxu0 %v409
      %441 = vmatprep.subr.bf16.mxu0 %v408
      %442 = vmatpush1.bf16.xpose.msra.mxu0 %v407
      %443 = vmatprep.subr.bf16.mxu0 %v406
      %444 = vmatpush1.bf16.xpose.msra.mxu0 %v405
      %445 = vmatprep.subr.bf16.mxu0 %v404
      %446 = vmatpush1.bf16.xpose.msra.mxu0 %v403
      %447 = vmatprep.subr.bf16.mxu0 %v402
      %448 = vmatpush1.bf16.xpose.msra.mxu0 %v401
      %449 = vmatprep.subr.bf16.mxu0 0
      %450 = vmatpush2.bf16.xpose.msra.mxu0 0
      %451 = vmatprep.subr.bf16.mxu0 0
      %452 = vmatpush2.bf16.xpose.msra.mxu0 0
      %453 = vmatprep.subr.bf16.mxu0 0
      %454 = vmatpush2.bf16.xpose.msra.mxu0 0
      %455 = vmatprep.subr.bf16.mxu0 0
      %456 = vmatpush2.bf16.xpose.msra.mxu0 0
      %457 = vmatprep.subr.bf16.mxu0 0
      %458 = vmatpush2.bf16.xpose.msra.mxu0 0
      %459 = vmatprep.subr.bf16.mxu0 0
      %460 = vmatpush2.bf16.xpose.msra.mxu0 0
      %461 = vmatprep.subr.bf16.mxu0 0
      %462 = vmatpush2.bf16.xpose.msra.mxu0 0
      %463 = vmatprep.subr.bf16.mxu0 0
      %464 = vmatpush2.bf16.xpose.msra.mxu0 0
      %465 = vmatprep.mubr.bf16.mxu0 %v322
      %466 = vmatmul.mubr.bf16.gmra.mxu0 %v321
      %v467 = vpop.f32.mrf.mxu0
      %v468 = vadd.f32 0.0, %v467
      %v469 = vpop.f32.mrf.mxu0
      %v470 = vpop.f32.mrf.mxu0
      %v471 = vadd.f32 0.0, %v470
      %v472 = vpop.f32.mrf.mxu0
      %473 = vmatprep.mubr.bf16.mxu0 %v324
      %474 = vmatmul.mubr.bf16.gmra.mxu0 %v323
      %v475 = vpop.f32.mrf.mxu0
      %v476 = vadd.f32 0.0, %v475
      %v477 = vpop.f32.mrf.mxu0
      %v478 = vpop.f32.mrf.mxu0
      %v479 = vadd.f32 0.0, %v478
      %v480 = vpop.f32.mrf.mxu0
      %481 = vmatprep.mubr.bf16.mxu0 %v326
      %482 = vmatmul.mubr.bf16.gmra.mxu0 %v325
      %v483 = vpop.f32.mrf.mxu0
      %v484 = vadd.f32 0.0, %v483
      %v485 = vpop.f32.mrf.mxu0
      %v486 = vpop.f32.mrf.mxu0
      %v487 = vadd.f32 0.0, %v486
      %v488 = vpop.f32.mrf.mxu0
      %489 = vmatprep.mubr.bf16.mxu0 %v328
      %490 = vmatmul.mubr.bf16.gmra.mxu0 %v327
      %v491 = vpop.f32.mrf.mxu0
      %v492 = vadd.f32 0.0, %v491
      %v493 = vpop.f32.mrf.mxu0
      %v494 = vpop.f32.mrf.mxu0
      %v495 = vadd.f32 0.0, %v494
      %v496 = vpop.f32.mrf.mxu0
      %497 = vmatprep.mubr.bf16.mxu0 %v330
      %498 = vmatmul.mubr.bf16.gmra.mxu0 %v329
      %v499 = vpop.f32.mrf.mxu0
      %v500 = vadd.f32 0.0, %v499
      %v501 = vpop.f32.mrf.mxu0
      %v502 = vpop.f32.mrf.mxu0
      %v503 = vadd.f32 0.0, %v502
      %v504 = vpop.f32.mrf.mxu0
      %505 = vmatprep.mubr.bf16.mxu0 %v332
      %506 = vmatmul.mubr.bf16.gmra.mxu0 %v331
      %v507 = vpop.f32.mrf.mxu0
      %v508 = vadd.f32 0.0, %v507
      %v509 = vpop.f32.mrf.mxu0
      %v510 = vpop.f32.mrf.mxu0
      %v511 = vadd.f32 0.0, %v510
      %v512 = vpop.f32.mrf.mxu0
      %513 = vmatprep.mubr.bf16.mxu0 %v334
      %514 = vmatmul.mubr.bf16.gmra.mxu0 %v333
      %v515 = vpop.f32.mrf.mxu0
      %v516 = vadd.f32 0.0, %v515
      %v517 = vpop.f32.mrf.mxu0
      %v518 = vpop.f32.mrf.mxu0
      %v519 = vadd.f32 0.0, %v518
      %v520 = vpop.f32.mrf.mxu0
      %521 = vmatprep.mubr.bf16.mxu0 %v336
      %522 = vmatmul.mubr.bf16.gmra.mxu0 %v335
      %v523 = vpop.f32.mrf.mxu0
      %v524 = vadd.f32 0.0, %v523
      %v525 = vpop.f32.mrf.mxu0
      %v526 = vpop.f32.mrf.mxu0
      %v527 = vadd.f32 0.0, %v526
      %v528 = vpop.f32.mrf.mxu0
      %529 = vdwg.mxu0
      %v530 = vmul.f32 %v468, 3.0
      %v531 = vmul.f32 %v471, 3.0
      %v532 = vmul.f32 %v476, 3.0
      %v533 = vmul.f32 %v479, 3.0
      %v534 = vmul.f32 %v484, 3.0
      %v535 = vmul.f32 %v487, 3.0
      %v536 = vmul.f32 %v492, 3.0
      %v537 = vmul.f32 %v495, 3.0
      %v538 = vmul.f32 %v500, 3.0
      %v539 = vmul.f32 %v503, 3.0
      %v540 = vmul.f32 %v508, 3.0
      %v541 = vmul.f32 %v511, 3.0
      %v542 = vmul.f32 %v516, 3.0
      %v543 = vmul.f32 %v519, 3.0
      %v544 = vmul.f32 %v524, 3.0
      %v545 = vmul.f32 %v527, 3.0
      %v546 = vmax.f32 %v530, 0.0
      %v547 = vmax.f32 %v531, 0.0
      %v548 = vmax.f32 %v532, 0.0
      %v549 = vmax.f32 %v533, 0.0
      %v550 = vmax.f32 %v534, 0.0
      %v551 = vmax.f32 %v535, 0.0
      %v552 = vmax.f32 %v536, 0.0
      %v553 = vmax.f32 %v537, 0.0
      %v554 = vmax.f32 %v538, 0.0
      %v555 = vmax.f32 %v539, 0.0
      %v556 = vmax.f32 %v540, 0.0
      %v557 = vmax.f32 %v541, 0.0
      %v558 = vmax.f32 %v542, 0.0
      %v559 = vmax.f32 %v543, 0.0
      %v560 = vmax.f32 %v544, 0.0
      %v561 = vmax.f32 %v545, 0.0
      %v562 = vpack.c.bf16 %v547, %v546
      %v563 = vpack.c.bf16 %v549, %v548
      %v564 = vpack.c.bf16 %v551, %v550
      %v565 = vpack.c.bf16 %v553, %v552
      %v566 = vpack.c.bf16 %v555, %v554
      %v567 = vpack.c.bf16 %v557, %v556
      %v568 = vpack.c.bf16 %v559, %v558
      %v569 = vpack.c.bf16 %v561, %v560
      %v578 = vunpack.c.l.b16 %v562
      %v579 = vunpack.c.h.b16 %v562
      %v580 = vunpack.c.l.b16 %v563
      %v581 = vunpack.c.h.b16 %v563
      %v582 = vunpack.c.l.b16 %v564
      %v583 = vunpack.c.h.b16 %v564
      %v584 = vunpack.c.l.b16 %v565
      %v585 = vunpack.c.h.b16 %v565
      %v586 = vunpack.c.l.b16 %v566
      %v587 = vunpack.c.h.b16 %v566
      %v588 = vunpack.c.l.b16 %v567
      %v589 = vunpack.c.h.b16 %v567
      %v590 = vunpack.c.l.b16 %v568
      %v591 = vunpack.c.h.b16 %v568
      %v592 = vunpack.c.l.b16 %v569
      %v593 = vunpack.c.h.b16 %v569
      %v594 = vpack.c.b16 %v578, %v578
      %v595 = vpack.c.b16 %v579, %v579
      %v596 = vpack.c.b16 %v580, %v580
      %v597 = vpack.c.b16 %v581, %v581
      %v598 = vpack.c.b16 %v582, %v582
      %v599 = vpack.c.b16 %v583, %v583
      %v600 = vpack.c.b16 %v584, %v584
      %v601 = vpack.c.b16 %v585, %v585
      %v602 = vpack.c.b16 %v586, %v586
      %v603 = vpack.c.b16 %v587, %v587
      %v604 = vpack.c.b16 %v588, %v588
      %v605 = vpack.c.b16 %v589, %v589
      %v606 = vpack.c.b16 %v590, %v590
      %v607 = vpack.c.b16 %v591, %v591
      %v608 = vpack.c.b16 %v592, %v592
      %v609 = vpack.c.b16 %v593, %v593
      %626 = vst [vmem:[%s238] sm:$0xf] %v594
      %627 = vst [vmem:[%s238 + $0x4] sm:$0xf] %v595
      %628 = vst [vmem:[%s238 + $0x8] sm:$0xf] %v596
      %629 = vst [vmem:[%s238 + $0xc] sm:$0xf] %v597
      %630 = vst [vmem:[%s238 + $0x10] sm:$0xf] %v598
      %631 = vst [vmem:[%s238 + $0x14] sm:$0xf] %v599
      %632 = vst [vmem:[%s238 + $0x18] sm:$0xf] %v600
      %633 = vst [vmem:[%s238 + $0x1c] sm:$0xf] %v601
      %634 = vst [vmem:[%s238 + $0x20] sm:$0xf] %v602
      %635 = vst [vmem:[%s238 + $0x24] sm:$0xf] %v603
      %636 = vst [vmem:[%s238 + $0x28] sm:$0xf] %v604
      %637 = vst [vmem:[%s238 + $0x2c] sm:$0xf] %v605
      %638 = vst [vmem:[%s238 + $0x30] sm:$0xf] %v606
      %639 = vst [vmem:[%s238 + $0x34] sm:$0xf] %v607
      %640 = vst [vmem:[%s238 + $0x38] sm:$0xf] %v608
      %641 = vst [vmem:[%s238 + $0x3c] sm:$0xf] %v609
      %s642 = smul.u32 16, %s19
      %p643 = scmp.lt.s32.totalorder %s18, 1
      %s644 = scalar_select %p643, %s18, 1
      %p645 = scmp.lt.s32.totalorder %s642, 15
      %s646 = scalar_select %p645, %s642, 15
      %p647 = scmp.lt.s32.totalorder %s20, 0
      %s648 = scalar_select %p647, %s20, 0
      %s649 = sadd.s32 %s648, %s646
      %s650 = smul.addr %s644, 16
      %s651 = sadd.s32 %s649, %s650
      %s652 = smul.addr %s651, 4
      %s653 = scalar_lea.vmem %s2, %s652
      // Predicated region
      $region29: #{_forward.3} parent=27 // pred_check
        %p654 = pneg %p110
      $region30: #{_forward.3} parent=27 // pred_check_branch
        %656 = sbr.rel (%p654) target = $region32
      $region31: #{_forward.3} parent=27 // pred_region
        %s657 = smul.u32 16, %s19
      $region32: #{_forward.3} parent=27 // pred_fallthru
        _
    $region28: #{_forward.3} parent=5 // pred_fallthru
      _
    %p658 = scmp.le.s32.totalorder 2, %s8
    // Predicated region
    $region33: #{_forward.3} parent=5 // pred_check
      %p659 = pneg %p658
    $region34: #{_forward.3} parent=5 // pred_check_branch
      %661 = sbr.rel (%p659) target = $region36
    $region35: #{_forward.3} parent=5 // pred_region
      %s662 = ssub.s32 %s8, 2
      // Predicated region
      $region37: #{_forward.3} parent=35 // pred_check
        %p663 = pneg %p116
      $region38: #{_forward.3} parent=35 // pred_check_branch
        %665 = sbr.rel (%p663) target = $region40
      $region39: #{_forward.3} parent=35 // pred_region
        %s666 = smul.u32 16, %s22
        %p667 = scmp.lt.s32.totalorder %s21, 1
        %s668 = scalar_select %p667, %s21, 1
        %p669 = scmp.lt.s32.totalorder %s666, 15
        %s670 = scalar_select %p669, %s666, 15
        %p671 = scmp.lt.s32.totalorder %s23, 0
        %s672 = scalar_select %p671, %s23, 0
        %s673 = sadd.s32 %s672, %s670
        %s674 = smul.addr %s668, 16
        %s675 = sadd.s32 %s673, %s674
        %s676 = smul.addr %s675, 4
        %s677 = scalar_lea.vmem %s2, %s676
      $region40: #{_forward.3} parent=35 // pred_fallthru
        _
    $region36: #{_forward.3} parent=5 // pred_fallthru
      _
  $region6: #{_forward.3} parent=0 // loop_footer
    %s12 = sadd.s32 1, %s8
  $region7: #{_forward.3} parent=0 // loop_footer_branch
    %7 = sbr.rel target = $region3
  $region8: #{_forward.3} parent=0 // loop_exit
    _

// kernel: _forward.2
$region0: #{_forward.2}
  #allocation0 [shape = 'u32[]', space=smem, size = 0x4, offset = 0x4, fixed_abs, tag = 'smem constant byte address 0x4 - core index']
  #allocation1 [shape = 'u32[144,128]{1,0:T(1,128)}', space=vmem, size = 0x12000, scoped, tag = 'internal scratch']
  #allocation2 [shape = 'f32[128,256]{1,0:T(8,128)}', space=vmem, size = 0x20000, scoped, tag = 'scratch operand']
  #allocation3 [shape = 's32[1]{0}', space=sflag, size = 0x4, scoped, tag = 'scratch operand']
  #allocation4 [shape = 's32[]', space=sflag, size = 0x4, offset = 0, fixed_abs, tag = 'sflag constant byte address 0x0 - dummy sync flag']
  %s0 = inlined_call_operand.vmem [shape: f32[128,256], index: 0, kind: input, shape index: {}]
  %s1 = inlined_call_operand.vmem [shape: bf16[2,256,256], index: 1, kind: input, shape index: {}]
  %s2 = inlined_call_operand.vmem [shape: f32[2,1,256], index: 2, kind: input, shape index: {}]
  %s3 = inlined_call_operand.vmem [shape: bf16[2,128,256], index: 3, kind: output, shape index: {0}]
  %s4 = inlined_call_operand.vmem [shape: bf16[2,128,256], index: 4, kind: output, shape index: {1}]
  %5 = xla_tuple %s3, %s4
  %s6 = sld [smem:[#allocation0]]
  $region87: #{_forward.2} parent=0
    _
  %s8 = ssub.s32 1, %s6
  %s9 = scalar_select 0, %s8, %s6
  loop: start=0, step=1, limit=4
  $region2: #{_forward.2} parent=0 // loop_pre_header
    _
  $region3: #{_forward.2} parent=0 // loop_header
    %s11 = sphi 0, %s15
    %p12 = scmp.ge.s32.totalorder %s11, 4
    %s21 = sphi 0, %s23
    %s24 = sphi 0, %s21
    %s25 = sphi 0, %s24
    %s41 = sphi 0, %s25
    %s47 = sphi 0, %s49
    %s50 = sphi 0, %s47
    %s51 = sphi 0, %s50
    %s67 = sphi 0, %s51
    %s73 = sphi 0, %s75
    %s76 = sphi 0, %s73
    %s77 = sphi 0, %s76
    %s93 = sphi 0, %s77
    %s99 = sphi 0, %s101
    %s102 = sphi 0, %s99
    %s103 = sphi 0, %s102
    %s119 = sphi 0, %s103
  $region4: #{_forward.2} parent=0 // loop_header_branch
    %14 = sbr.rel (%p12) target = $region8
  $region5: #{_forward.2} parent=0 // loop_body
    %s16 = ssub.s32 %s11, 1
    %s17 = ssub.s32 %s11, 2
    %s18 = sadd.s32 %s11, 1
    %s19 = ssub.s32 %s11, %s18
    %p20 = scmp.eq.s32.totalorder %s19, 0
    %s22 = sadd.s32 %s21, 1
    %s23 = scalar_select %p20, %s21, %s22
    %p26 = pneg %p20
    %p27 = scmp.eq.s32.totalorder %s11, 1
    %p28 = por %p26, %p27
    %p29 = scmp.ne.s32.totalorder %s21, %s24
    %p30 = scmp.eq.s32.totalorder %s11, 0
    %p31 = por %p29, %p30
    %p32 = scmp.ne.s32.totalorder %s21, %s24
    %p33 = scmp.eq.s32.totalorder %s16, 1
    %p34 = por %p32, %p33
    %p35 = scmp.ne.s32.totalorder %s24, %s25
    %p36 = scmp.eq.s32.totalorder %s16, 0
    %p37 = por %p35, %p36
    %p38 = scmp.ne.s32.totalorder %s24, %s25
    %p39 = scmp.eq.s32.totalorder %s17, 1
    %p40 = por %p38, %p39
    %p42 = scmp.ne.s32.totalorder %s25, %s41
    %p43 = scmp.eq.s32.totalorder %s17, 0
    %p44 = por %p42, %p43
    %s45 = ssub.s32 %s11, %s18
    %p46 = scmp.eq.s32.totalorder %s45, 0
    %s48 = sadd.s32 %s47, 1
    %s49 = scalar_select %p46, %s47, %s48
    %p52 = pneg %p46
    %p53 = scmp.eq.s32.totalorder %s11, 1
    %p54 = por %p52, %p53
    %p55 = scmp.ne.s32.totalorder %s47, %s50
    %p56 = scmp.eq.s32.totalorder %s11, 0
    %p57 = por %p55, %p56
    %p58 = scmp.ne.s32.totalorder %s47, %s50
    %p59 = scmp.eq.s32.totalorder %s16, 1
    %p60 = por %p58, %p59
    %p61 = scmp.ne.s32.totalorder %s50, %s51
    %p62 = scmp.eq.s32.totalorder %s16, 0
    %p63 = por %p61, %p62
    %p64 = scmp.ne.s32.totalorder %s50, %s51
    %p65 = scmp.eq.s32.totalorder %s17, 1
    %p66 = por %p64, %p65
    %p68 = scmp.ne.s32.totalorder %s51, %s67
    %p69 = scmp.eq.s32.totalorder %s17, 0
    %p70 = por %p68, %p69
    %s71 = ssub.s32 %s11, %s18
    %p72 = scmp.eq.s32.totalorder %s71, 0
    %s74 = sadd.s32 %s73, 1
    %s75 = scalar_select %p72, %s73, %s74
    %p78 = pneg %p72
    %p79 = scmp.eq.s32.totalorder %s11, 1
    %p80 = por %p78, %p79
    %p81 = scmp.ne.s32.totalorder %s73, %s76
    %p82 = scmp.eq.s32.totalorder %s11, 0
    %p83 = por %p81, %p82
    %p84 = scmp.ne.s32.totalorder %s73, %s76
    %p85 = scmp.eq.s32.totalorder %s16, 1
    %p86 = por %p84, %p85
    %p87 = scmp.ne.s32.totalorder %s76, %s77
    %p88 = scmp.eq.s32.totalorder %s16, 0
    %p89 = por %p87, %p88
    %p90 = scmp.ne.s32.totalorder %s76, %s77
    %p91 = scmp.eq.s32.totalorder %s17, 1
    %p92 = por %p90, %p91
    %p94 = scmp.ne.s32.totalorder %s77, %s93
    %p95 = scmp.eq.s32.totalorder %s17, 0
    %p96 = por %p94, %p95
    %s97 = ssub.s32 %s11, %s18
    %p98 = scmp.eq.s32.totalorder %s97, 0
    %s100 = sadd.s32 %s99, 1
    %s101 = scalar_select %p98, %s99, %s100
    %p104 = pneg %p98
    %p105 = scmp.eq.s32.totalorder %s11, 1
    %p106 = por %p104, %p105
    %p107 = scmp.ne.s32.totalorder %s99, %s102
    %p108 = scmp.eq.s32.totalorder %s11, 0
    %p109 = por %p107, %p108
    %p110 = scmp.ne.s32.totalorder %s99, %s102
    %p111 = scmp.eq.s32.totalorder %s16, 1
    %p112 = por %p110, %p111
    %p113 = scmp.ne.s32.totalorder %s102, %s103
    %p114 = scmp.eq.s32.totalorder %s16, 0
    %p115 = por %p113, %p114
    %p116 = scmp.ne.s32.totalorder %s102, %s103
    %p117 = scmp.eq.s32.totalorder %s17, 1
    %p118 = por %p116, %p117
    %p120 = scmp.ne.s32.totalorder %s103, %s119
    %p121 = scmp.eq.s32.totalorder %s17, 0
    %p122 = por %p120, %p121
    %p123 = scmp.le.s32.totalorder 1, %s11
    %p124 = scmp.lt.s32.totalorder %s11, 3
    %p125 = pnand %p123, %p124
    %p126 = pneg %p125
    // Predicated region
    $region9: #{_forward.2} parent=5 // pred_check
      _
    $region10: #{_forward.2} parent=5 // pred_check_branch
      %128 = sbr.rel (%p125) target = $region12
    $region11: #{_forward.2} parent=5 // pred_region
      %s129 = ssub.s32 %s11, 1
    $region12: #{_forward.2} parent=5 // pred_fallthru
      _
    %p130 = scmp.lt.s32.totalorder %s11, 2
    // Predicated region
    $region13: #{_forward.2} parent=5 // pred_check
      %p131 = pneg %p130
    $region14: #{_forward.2} parent=5 // pred_check_branch
      %133 = sbr.rel (%p131) target = $region16
    $region15: #{_forward.2} parent=5 // pred_region
      // Predicated region
      $region17: #{_forward.2} parent=15 // pred_check
        %p134 = pneg %p31
      $region18: #{_forward.2} parent=15 // pred_check_branch
        %136 = sbr.rel (%p134) target = $region20
      $region19: #{_forward.2} parent=15 // pred_region
        %p137 = scmp.lt.s32.totalorder %s11, 1
        %s138 = scalar_select %p137, %s11, 1
        %s139 = smul.addr %s138, 64
        %s140 = smul.addr %s139, 4
        %s141 = scalar_lea.vmem %s1, %s140
      $region20: #{_forward.2} parent=15 // pred_fallthru
        _
      // Predicated region
      $region21: #{_forward.2} parent=15 // pred_check
        %p142 = pneg %p57
      $region22: #{_forward.2} parent=15 // pred_check_branch
        %144 = sbr.rel (%p142) target = $region24
      $region23: #{_forward.2} parent=15 // pred_region
        %p145 = scmp.lt.s32.totalorder %s11, 1
        %s146 = scalar_select %p145, %s11, 1
        %s147 = smul.addr %s146, 2
        %s148 = scalar_lea.vmem %s2, %s147
      $region24: #{_forward.2} parent=15 // pred_fallthru
        _
    $region16: #{_forward.2} parent=5 // pred_fallthru
      _
    %p149 = scmp.le.s32.totalorder 1, %s11
    %p150 = scmp.lt.s32.totalorder %s11, 3
    %p151 = pnand %p149, %p150
    %p152 = pneg %p151
    // Predicated region
    $region25: #{_forward.2} parent=5 // pred_check
      _
    $region26: #{_forward.2} parent=5 // pred_check_branch
      %154 = sbr.rel (%p151) target = $region28
    $region27: #{_forward.2} parent=5 // pred_region
      %s155 = ssub.s32 %s11, 1
      %p156 = scmp.lt.s32.totalorder %s16, 1
      %s157 = scalar_select %p156, %s16, 1
      %s158 = smul.addr %s157, 64
      %s159 = smul.addr %s158, 4
      %s160 = scalar_lea.vmem %s1, %s159
      %p161 = pneg %p37
      %p162 = pneg %p34
      %p163 = scmp.lt.s32.totalorder %s16, 1
      %s164 = scalar_select %p163, %s16, 1
      %s165 = smul.addr %s164, 2
      %s166 = scalar_lea.vmem %s2, %s165
      %p167 = pneg %p63
      %p168 = pneg %p60
      %p169 = pneg %p89
      %p170 = pneg %p86
      %p171 = scmp.lt.s32.totalorder %s16, 1
      %s172 = scalar_select %p171, %s16, 1
      %s173 = smul.addr %s172, 32
      %s174 = smul.addr %s173, 4
      %s175 = scalar_lea.vmem %s3, %s174
      %p176 = pneg %p115
      %p177 = pneg %p112
      %p178 = scmp.lt.s32.totalorder %s16, 1
      %s179 = scalar_select %p178, %s16, 1
      %s180 = smul.addr %s179, 32
      %s181 = smul.addr %s180, 4
      %s182 = scalar_lea.vmem %s4, %s181
      %p183 = scmp.lt.s32.totalorder %s16, 1
      %s184 = scalar_select %p183, %s16, 1
      %s185 = smul.addr %s184, 64
      %s186 = smul.addr %s185, 4
      %s187 = scalar_lea.vmem %s1, %s186
      %p188 = scmp.lt.s32.totalorder %s16, 1
      %s189 = scalar_select %p188, %s16, 1
      %s190 = smul.addr %s189, 2
      %s191 = scalar_lea.vmem %s2, %s190
      %p192 = scmp.lt.s32.totalorder %s16, 1
      %s193 = scalar_select %p192, %s16, 1
      %s194 = smul.addr %s193, 32
      %s195 = smul.addr %s194, 4
      %s196 = scalar_lea.vmem %s3, %s195
      %p197 = scmp.lt.s32.totalorder %s16, 1
      %s198 = scalar_select %p197, %s16, 1
      %s199 = smul.addr %s198, 32
      %s200 = smul.addr %s199, 4
      %s201 = scalar_lea.vmem %s4, %s200
      %p202 = scmp.eq.s32.totalorder %s16, 0
      // Predicated region
      $region29: #{_forward.2} parent=27 // pred_check
        %p203 = pneg %p202
      $region30: #{_forward.2} parent=27 // pred_check_branch
        %205 = sbr.rel (%p203) target = $region32
      $region31: #{_forward.2} parent=27 // pred_region
        %p207 = scmp.lt.u32.totalorder 256, 8
        %p208 = pneg %p207
        // Predicated region
        $region33: #{_forward.2} parent=31 // pred_check
          _
        $region34: #{_forward.2} parent=31 // pred_check_branch
          %210 = sbr.rel (%p207) target = $region36
        $region35: #{_forward.2} parent=31 // pred_region
          %s226 = sand.u32 256, 7
          %p227 = scmp.eq.s32.totalorder %s226, 0
          // Predicated region
          $region48: #{_forward.2} parent=35 // pred_check
            %p228 = pneg %p227
          $region49: #{_forward.2} parent=35 // pred_check_branch
            %230 = sbr.rel (%p228) target = $region51
          $region50: #{_forward.2} parent=35 // pred_region
            loop: start=0, step=1, limit=1
            $region52: #{_forward.2} parent=50 // loop_pre_header
              _
            $region53: #{_forward.2} parent=50 // loop_header
              %s232 = sphi 0, %s236
              %p233 = scmp.ge.s32.totalorder %s232, 1
              %s237 = sphi %s0, %s0
              %s238 = sphi [#allocation2], [#allocation2]
            $region54: #{_forward.2} parent=50 // loop_header_branch
              %235 = sbr.rel (%p233) target = $region58
            $region55: #{_forward.2} parent=50 // loop_body
              %v239 = vld [vmem:[%s237] sm:$0xff]
              %240 = vst [vmem:[%s238] sm:$0xff] %v239
              %v241 = vld [vmem:[%s237 + $0x8] sm:$0xff]
              %242 = vst [vmem:[%s238 + $0x8] sm:$0xff] %v241
              %v243 = vld [vmem:[%s237 + $0x10] sm:$0xff]
              %244 = vst [vmem:[%s238 + $0x10] sm:$0xff] %v243
              %v245 = vld [vmem:[%s237 + $0x18] sm:$0xff]
              %246 = vst [vmem:[%s238 + $0x18] sm:$0xff] %v245
              %v247 = vld [vmem:[%s237 + $0x20] sm:$0xff]
              %248 = vst [vmem:[%s238 + $0x20] sm:$0xff] %v247
              %v249 = vld [vmem:[%s237 + $0x28] sm:$0xff]
              %250 = vst [vmem:[%s238 + $0x28] sm:$0xff] %v249
              %v251 = vld [vmem:[%s237 + $0x30] sm:$0xff]
              %252 = vst [vmem:[%s238 + $0x30] sm:$0xff] %v251
              %v253 = vld [vmem:[%s237 + $0x38] sm:$0xff]
              %254 = vst [vmem:[%s238 + $0x38] sm:$0xff] %v253
              %v255 = vld [vmem:[%s237 + $0x40] sm:$0xff]
              %256 = vst [vmem:[%s238 + $0x40] sm:$0xff] %v255
              %v257 = vld [vmem:[%s237 + $0x48] sm:$0xff]
              %258 = vst [vmem:[%s238 + $0x48] sm:$0xff] %v257
              %v259 = vld [vmem:[%s237 + $0x50] sm:$0xff]
              %260 = vst [vmem:[%s238 + $0x50] sm:$0xff] %v259
              %v261 = vld [vmem:[%s237 + $0x58] sm:$0xff]
              %262 = vst [vmem:[%s238 + $0x58] sm:$0xff] %v261
              %v263 = vld [vmem:[%s237 + $0x60] sm:$0xff]
              %264 = vst [vmem:[%s238 + $0x60] sm:$0xff] %v263
              %v265 = vld [vmem:[%s237 + $0x68] sm:$0xff]
              %266 = vst [vmem:[%s238 + $0x68] sm:$0xff] %v265
              %v267 = vld [vmem:[%s237 + $0x70] sm:$0xff]
              %268 = vst [vmem:[%s238 + $0x70] sm:$0xff] %v267
              %v269 = vld [vmem:[%s237 + $0x78] sm:$0xff]
              %270 = vst [vmem:[%s238 + $0x78] sm:$0xff] %v269
              %v271 = vld [vmem:[%s237 + $0x80] sm:$0xff]
              %272 = vst [vmem:[%s238 + $0x80] sm:$0xff] %v271
              %v273 = vld [vmem:[%s237 + $0x88] sm:$0xff]
              %274 = vst [vmem:[%s238 + $0x88] sm:$0xff] %v273
              %v275 = vld [vmem:[%s237 + $0x90] sm:$0xff]
              %276 = vst [vmem:[%s238 + $0x90] sm:$0xff] %v275
              %v277 = vld [vmem:[%s237 + $0x98] sm:$0xff]
              %278 = vst [vmem:[%s238 + $0x98] sm:$0xff] %v277
              %v279 = vld [vmem:[%s237 + $0xa0] sm:$0xff]
              %280 = vst [vmem:[%s238 + $0xa0] sm:$0xff] %v279
              %v281 = vld [vmem:[%s237 + $0xa8] sm:$0xff]
              %282 = vst [vmem:[%s238 + $0xa8] sm:$0xff] %v281
              %v283 = vld [vmem:[%s237 + $0xb0] sm:$0xff]
              %284 = vst [vmem:[%s238 + $0xb0] sm:$0xff] %v283
              %v285 = vld [vmem:[%s237 + $0xb8] sm:$0xff]
              %286 = vst [vmem:[%s238 + $0xb8] sm:$0xff] %v285
              %v287 = vld [vmem:[%s237 + $0xc0] sm:$0xff]
              %288 = vst [vmem:[%s238 + $0xc0] sm:$0xff] %v287
              %v289 = vld [vmem:[%s237 + $0xc8] sm:$0xff]
              %290 = vst [vmem:[%s238 + $0xc8] sm:$0xff] %v289
              %v291 = vld [vmem:[%s237 + $0xd0] sm:$0xff]
              %292 = vst [vmem:[%s238 + $0xd0] sm:$0xff] %v291
              %v293 = vld [vmem:[%s237 + $0xd8] sm:$0xff]
              %294 = vst [vmem:[%s238 + $0xd8] sm:$0xff] %v293
              %v295 = vld [vmem:[%s237 + $0xe0] sm:$0xff]
              %296 = vst [vmem:[%s238 + $0xe0] sm:$0xff] %v295
              %v297 = vld [vmem:[%s237 + $0xe8] sm:$0xff]
              %298 = vst [vmem:[%s238 + $0xe8] sm:$0xff] %v297
              %v299 = vld [vmem:[%s237 + $0xf0] sm:$0xff]
              %300 = vst [vmem:[%s238 + $0xf0] sm:$0xff] %v299
              %v301 = vld [vmem:[%s237 + $0xf8] sm:$0xff]
              %302 = vst [vmem:[%s238 + $0xf8] sm:$0xff] %v301
            $region56: #{_forward.2} parent=50 // loop_footer
              %s236 = sadd.s32 1, %s232
            $region57: #{_forward.2} parent=50 // loop_footer_branch
              %231 = sbr.rel target = $region53
            $region58: #{_forward.2} parent=50 // loop_exit
              _
          $region51: #{_forward.2} parent=35 // pred_fallthru
            _
          %p303 = pneg %p227
          // Predicated region
          $region59: #{_forward.2} parent=35 // pred_check
            _
          $region60: #{_forward.2} parent=35 // pred_check_branch
            %305 = sbr.rel (%p227) target = $region62
          $region61: #{_forward.2} parent=35 // pred_region
            %s306 = sand.u32 256, 7
          $region62: #{_forward.2} parent=35 // pred_fallthru
            _
        $region36: #{_forward.2} parent=31 // pred_fallthru
          _
        // Predicated region
        $region37: #{_forward.2} parent=31 // pred_check
          %p211 = pneg %p207
        $region38: #{_forward.2} parent=31 // pred_check_branch
          %213 = sbr.rel (%p211) target = $region40
        $region39: #{_forward.2} parent=31 // pred_region
          %s214 = sshll.u32 1, 256
          %s215 = ssub.s32 %s214, 1
          loop: start=0, step=1, limit=1
          $region41: #{_forward.2} parent=39 // loop_pre_header
            _
          $region42: #{_forward.2} parent=39 // loop_header
            %s217 = sphi 0, %s221
            %p218 = scmp.ge.s32.totalorder %s217, 1
            %s222 = sphi %s0, %s0
            %s223 = sphi [#allocation2], [#allocation2]
          $region43: #{_forward.2} parent=39 // loop_header_branch
            %220 = sbr.rel (%p218) target = $region47
          $region44: #{_forward.2} parent=39 // loop_body
            %v224 = vld [vmem:[%s222] sm:%s215]
            %225 = vst [vmem:[%s223] sm:%s215] %v224
          $region45: #{_forward.2} parent=39 // loop_footer
            %s221 = sadd.s32 1, %s217
          $region46: #{_forward.2} parent=39 // loop_footer_branch
            %216 = sbr.rel target = $region42
          $region47: #{_forward.2} parent=39 // loop_exit
            _
        $region40: #{_forward.2} parent=31 // pred_fallthru
          _
        // Predicated region
        $region63: #{_forward.2} parent=31 // pred_check
          _
        $region64: #{_forward.2} parent=31 // pred_check_branch
          %309 = sbr.rel (0) target = $region66
        $region65: #{_forward.2} parent=31 // pred_region
          %310 = vsyncadd [#allocation3], 4096
        $region66: #{_forward.2} parent=31 // pred_fallthru
          _
        %s311 = smul.u32 8, 16
        %s312 = smul.u32 %s311, 2
        %s313 = sshll.u32 %s312, 4
        %314 = dma.done [#allocation3], %s313
      $region32: #{_forward.2} parent=27 // pred_fallthru
        _
      %v315 = vld [vmem:[#allocation2] sm:$0xff]
      %v316 = vld [vmem:[#allocation2 + $0x8] sm:$0xff]
      %v317 = vld [vmem:[#allocation2 + $0x10] sm:$0xff]
      %v318 = vld [vmem:[#allocation2 + $0x18] sm:$0xff]
      %v319 = vld [vmem:[#allocation2 + $0x20] sm:$0xff]
      %v320 = vld [vmem:[#allocation2 + $0x28] sm:$0xff]
      %v321 = vld [vmem:[#allocation2 + $0x30] sm:$0xff]
      %v322 = vld [vmem:[#allocation2 + $0x38] sm:$0xff]
      %v323 = vld [vmem:[#allocation2 + $0x40] sm:$0xff]
      %v324 = vld [vmem:[#allocation2 + $0x48] sm:$0xff]
      %v325 = vld [vmem:[#allocation2 + $0x50] sm:$0xff]
      %v326 = vld [vmem:[#allocation2 + $0x58] sm:$0xff]
      %v327 = vld [vmem:[#allocation2 + $0x60] sm:$0xff]
      %v328 = vld [vmem:[#allocation2 + $0x68] sm:$0xff]
      %v329 = vld [vmem:[#allocation2 + $0x70] sm:$0xff]
      %v330 = vld [vmem:[#allocation2 + $0x78] sm:$0xff]
      %v331 = vld [vmem:[#allocation2 + $0x80] sm:$0xff]
      %v332 = vld [vmem:[#allocation2 + $0x88] sm:$0xff]
      %v333 = vld [vmem:[#allocation2 + $0x90] sm:$0xff]
      %v334 = vld [vmem:[#allocation2 + $0x98] sm:$0xff]
      %v335 = vld [vmem:[#allocation2 + $0xa0] sm:$0xff]
      %v336 = vld [vmem:[#allocation2 + $0xa8] sm:$0xff]
      %v337 = vld [vmem:[#allocation2 + $0xb0] sm:$0xff]
      %v338 = vld [vmem:[#allocation2 + $0xb8] sm:$0xff]
      %v339 = vld [vmem:[#allocation2 + $0xc0] sm:$0xff]
      %v340 = vld [vmem:[#allocation2 + $0xc8] sm:$0xff]
      %v341 = vld [vmem:[#allocation2 + $0xd0] sm:$0xff]
      %v342 = vld [vmem:[#allocation2 + $0xd8] sm:$0xff]
      %v343 = vld [vmem:[#allocation2 + $0xe0] sm:$0xff]
      %v344 = vld [vmem:[#allocation2 + $0xe8] sm:$0xff]
      %v345 = vld [vmem:[#allocation2 + $0xf0] sm:$0xff]
      %v346 = vld [vmem:[#allocation2 + $0xf8] sm:$0xff]
      %v347 = vpack.c.bf16 %v317, %v315
      %v348 = vpack.c.bf16 %v318, %v316
      %v349 = vpack.c.bf16 %v321, %v319
      %v350 = vpack.c.bf16 %v322, %v320
      %v351 = vpack.c.bf16 %v325, %v323
      %v352 = vpack.c.bf16 %v326, %v324
      %v353 = vpack.c.bf16 %v329, %v327
      %v354 = vpack.c.bf16 %v330, %v328
      %v355 = vpack.c.bf16 %v333, %v331
      %v356 = vpack.c.bf16 %v334, %v332
      %v357 = vpack.c.bf16 %v337, %v335
      %v358 = vpack.c.bf16 %v338, %v336
      %v359 = vpack.c.bf16 %v341, %v339
      %v360 = vpack.c.bf16 %v342, %v340
      %v361 = vpack.c.bf16 %v345, %v343
      %v362 = vpack.c.bf16 %v346, %v344
      %v363 = vld [vmem:[%s187] sm:$0xff]
      %v364 = vld [vmem:[%s187 + $0x8] sm:$0xff]
      %v365 = vld [vmem:[%s187 + $0x10] sm:$0xff]
      %v366 = vld [vmem:[%s187 + $0x18] sm:$0xff]
      %v367 = vld [vmem:[%s187 + $0x20] sm:$0xff]
      %v368 = vld [vmem:[%s187 + $0x28] sm:$0xff]
      %v369 = vld [vmem:[%s187 + $0x30] sm:$0xff]
      %v370 = vld [vmem:[%s187 + $0x38] sm:$0xff]
      %v371 = vld [vmem:[%s187 + $0x40] sm:$0xff]
      %v372 = vld [vmem:[%s187 + $0x48] sm:$0xff]
      %v373 = vld [vmem:[%s187 + $0x50] sm:$0xff]
      %v374 = vld [vmem:[%s187 + $0x58] sm:$0xff]
      %v375 = vld [vmem:[%s187 + $0x60] sm:$0xff]
      %v376 = vld [vmem:[%s187 + $0x68] sm:$0xff]
      %v377 = vld [vmem:[%s187 + $0x70] sm:$0xff]
      %v378 = vld [vmem:[%s187 + $0x78] sm:$0xff]
      %v379 = vld [vmem:[%s187 + $0x80] sm:$0xff]
      %v380 = vld [vmem:[%s187 + $0x88] sm:$0xff]
      %v381 = vld [vmem:[%s187 + $0x90] sm:$0xff]
      %v382 = vld [vmem:[%s187 + $0x98] sm:$0xff]
      %v383 = vld [vmem:[%s187 + $0xa0] sm:$0xff]
      %v384 = vld [vmem:[%s187 + $0xa8] sm:$0xff]
      %v385 = vld [vmem:[%s187 + $0xb0] sm:$0xff]
      %v386 = vld [vmem:[%s187 + $0xb8] sm:$0xff]
      %v387 = vld [vmem:[%s187 + $0xc0] sm:$0xff]
      %v388 = vld [vmem:[%s187 + $0xc8] sm:$0xff]
      %v389 = vld [vmem:[%s187 + $0xd0] sm:$0xff]
      %v390 = vld [vmem:[%s187 + $0xd8] sm:$0xff]
      %v391 = vld [vmem:[%s187 + $0xe0] sm:$0xff]
      %v392 = vld [vmem:[%s187 + $0xe8] sm:$0xff]
      %v393 = vld [vmem:[%s187 + $0xf0] sm:$0xff]
      %v394 = vld [vmem:[%s187 + $0xf8] sm:$0xff]
      %v395 = vld [vmem:[%s191] sm:$0x3]
      %v397 = vlaneseq
      %v398 = vshrl.u32 %v397, 7
      %v399 = vsub.s32 0, %v398
      %v400 = vrot.slane %v395, %v399
      %v401 = vlaneseq
      %v402 = vshrl.u32 %v401, 7
      %v403 = vsub.s32 1, %v402
      %v404 = vrot.slane %v395, %v403
      %v439 = vunpack.c.l.b16 %v363
      %v440 = vunpack.c.h.b16 %v363
      %v441 = vunpack.c.l.b16 %v364
      %v442 = vunpack.c.h.b16 %v364
      %v443 = vunpack.c.l.b16 %v365
      %v444 = vunpack.c.h.b16 %v365
      %v445 = vunpack.c.l.b16 %v366
      %v446 = vunpack.c.h.b16 %v366
      %v447 = vunpack.c.l.b16 %v367
      %v448 = vunpack.c.h.b16 %v367
      %v449 = vunpack.c.l.b16 %v368
      %v450 = vunpack.c.h.b16 %v368
      %v451 = vunpack.c.l.b16 %v369
      %v452 = vunpack.c.h.b16 %v369
      %v453 = vunpack.c.l.b16 %v370
      %v454 = vunpack.c.h.b16 %v370
      %v455 = vunpack.c.l.b16 %v371
      %v456 = vunpack.c.h.b16 %v371
      %v457 = vunpack.c.l.b16 %v372
      %v458 = vunpack.c.h.b16 %v372
      %v459 = vunpack.c.l.b16 %v373
      %v460 = vunpack.c.h.b16 %v373
      %v461 = vunpack.c.l.b16 %v374
      %v462 = vunpack.c.h.b16 %v374
      %v463 = vunpack.c.l.b16 %v375
      %v464 = vunpack.c.h.b16 %v375
      %v465 = vunpack.c.l.b16 %v376
      %v466 = vunpack.c.h.b16 %v376
      %v467 = vunpack.c.l.b16 %v377
      %v468 = vunpack.c.h.b16 %v377
      %v469 = vunpack.c.l.b16 %v378
      %v470 = vunpack.c.h.b16 %v378
      %v471 = vunpack.c.l.b16 %v379
      %v472 = vunpack.c.h.b16 %v379
      %v473 = vunpack.c.l.b16 %v380
      %v474 = vunpack.c.h.b16 %v380
      %v475 = vunpack.c.l.b16 %v381
      %v476 = vunpack.c.h.b16 %v381
      %v477 = vunpack.c.l.b16 %v382
      %v478 = vunpack.c.h.b16 %v382
      %v479 = vunpack.c.l.b16 %v383
      %v480 = vunpack.c.h.b16 %v383
      %v481 = vunpack.c.l.b16 %v384
      %v482 = vunpack.c.h.b16 %v384
      %v483 = vunpack.c.l.b16 %v385
      %v484 = vunpack.c.h.b16 %v385
      %v485 = vunpack.c.l.b16 %v386
      %v486 = vunpack.c.h.b16 %v386
      %v487 = vunpack.c.l.b16 %v387
      %v488 = vunpack.c.h.b16 %v387
      %v489 = vunpack.c.l.b16 %v388
      %v490 = vunpack.c.h.b16 %v388
      %v491 = vunpack.c.l.b16 %v389
      %v492 = vunpack.c.h.b16 %v389
      %v493 = vunpack.c.l.b16 %v390
      %v494 = vunpack.c.h.b16 %v390
      %v495 = vunpack.c.l.b16 %v391
      %v496 = vunpack.c.h.b16 %v391
      %v497 = vunpack.c.l.b16 %v392
      %v498 = vunpack.c.h.b16 %v392
      %v499 = vunpack.c.l.b16 %v393
      %v500 = vunpack.c.h.b16 %v393
      %v501 = vunpack.c.l.b16 %v394
      %v502 = vunpack.c.h.b16 %v394
      %v503 = vpack.c.b16 %v441, %v439
      %v504 = vpack.c.b16 %v442, %v440
      %v505 = vpack.c.b16 %v445, %v443
      %v506 = vpack.c.b16 %v446, %v444
      %v507 = vpack.c.b16 %v449, %v447
      %v508 = vpack.c.b16 %v450, %v448
      %v509 = vpack.c.b16 %v453, %v451
      %v510 = vpack.c.b16 %v454, %v452
      %v511 = vpack.c.b16 %v457, %v455
      %v512 = vpack.c.b16 %v458, %v456
      %v513 = vpack.c.b16 %v461, %v459
      %v514 = vpack.c.b16 %v462, %v460
      %v515 = vpack.c.b16 %v465, %v463
      %v516 = vpack.c.b16 %v466, %v464
      %v517 = vpack.c.b16 %v469, %v467
      %v518 = vpack.c.b16 %v470, %v468
      %v519 = vpack.c.b16 %v473, %v471
      %v520 = vpack.c.b16 %v474, %v472
      %v521 = vpack.c.b16 %v477, %v475
      %v522 = vpack.c.b16 %v478, %v476
      %v523 = vpack.c.b16 %v481, %v479
      %v524 = vpack.c.b16 %v482, %v480
      %v525 = vpack.c.b16 %v485, %v483
      %v526 = vpack.c.b16 %v486, %v484
      %v527 = vpack.c.b16 %v489, %v487
      %v528 = vpack.c.b16 %v490, %v488
      %v529 = vpack.c.b16 %v493, %v491
      %v530 = vpack.c.b16 %v494, %v492
      %v531 = vpack.c.b16 %v497, %v495
      %v532 = vpack.c.b16 %v498, %v496
      %v533 = vpack.c.b16 %v501, %v499
      %v534 = vpack.c.b16 %v502, %v500
      %567 = vmatprep.subr.bf16.mxu0 %v518
      %568 = vmatpush1.bf16.xpose.msra.mxu0 %v517
      %569 = vmatprep.subr.bf16.mxu0 %v516
      %570 = vmatpush1.bf16.xpose.msra.mxu0 %v515
      %571 = vmatprep.subr.bf16.mxu0 %v514
      %572 = vmatpush1.bf16.xpose.msra.mxu0 %v513
      %573 = vmatprep.subr.bf16.mxu0 %v512
      %574 = vmatpush1.bf16.xpose.msra.mxu0 %v511
      %575 = vmatprep.subr.bf16.mxu0 %v510
      %576 = vmatpush1.bf16.xpose.msra.mxu0 %v509
      %577 = vmatprep.subr.bf16.mxu0 %v508
      %578 = vmatpush1.bf16.xpose.msra.mxu0 %v507
      %579 = vmatprep.subr.bf16.mxu0 %v506
      %580 = vmatpush1.bf16.xpose.msra.mxu0 %v505
      %581 = vmatprep.subr.bf16.mxu0 %v504
      %582 = vmatpush1.bf16.xpose.msra.mxu0 %v503
      %583 = vmatprep.subr.bf16.mxu0 %v534
      %584 = vmatpush2.bf16.xpose.msra.mxu0 %v533
      %585 = vmatprep.subr.bf16.mxu0 %v532
      %586 = vmatpush2.bf16.xpose.msra.mxu0 %v531
      %587 = vmatprep.subr.bf16.mxu0 %v530
      %588 = vmatpush2.bf16.xpose.msra.mxu0 %v529
      %589 = vmatprep.subr.bf16.mxu0 %v528
      %590 = vmatpush2.bf16.xpose.msra.mxu0 %v527
      %591 = vmatprep.subr.bf16.mxu0 %v526
      %592 = vmatpush2.bf16.xpose.msra.mxu0 %v525
      %593 = vmatprep.subr.bf16.mxu0 %v524
      %594 = vmatpush2.bf16.xpose.msra.mxu0 %v523
      %595 = vmatprep.subr.bf16.mxu0 %v522
      %596 = vmatpush2.bf16.xpose.msra.mxu0 %v521
      %597 = vmatprep.subr.bf16.mxu0 %v520
      %598 = vmatpush2.bf16.xpose.msra.mxu0 %v519
      %599 = vmatprep.mubr.bf16.mxu0 %v348
      %600 = vmatmul.mubr.bf16.gmra.mxu0 %v347
      %v601 = vpop.f32.mrf.mxu0
      %v602 = vadd.f32 %v400, %v601
      %v603 = vpop.f32.mrf.mxu0
      %v604 = vadd.f32 %v404, %v603
      %v605 = vpop.f32.mrf.mxu0
      %v606 = vadd.f32 %v400, %v605
      %v607 = vpop.f32.mrf.mxu0
      %v608 = vadd.f32 %v404, %v607
      %609 = vmatprep.mubr.bf16.mxu0 %v350
      %610 = vmatmul.mubr.bf16.gmra.mxu0 %v349
      %v611 = vpop.f32.mrf.mxu0
      %v612 = vadd.f32 %v400, %v611
      %v613 = vpop.f32.mrf.mxu0
      %v614 = vadd.f32 %v404, %v613
      %v615 = vpop.f32.mrf.mxu0
      %v616 = vadd.f32 %v400, %v615
      %v617 = vpop.f32.mrf.mxu0
      %v618 = vadd.f32 %v404, %v617
      %619 = vmatprep.mubr.bf16.mxu0 %v352
      %620 = vmatmul.mubr.bf16.gmra.mxu0 %v351
      %v621 = vpop.f32.mrf.mxu0
      %v622 = vadd.f32 %v400, %v621
      %v623 = vpop.f32.mrf.mxu0
      %v624 = vadd.f32 %v404, %v623
      %v625 = vpop.f32.mrf.mxu0
      %v626 = vadd.f32 %v400, %v625
      %v627 = vpop.f32.mrf.mxu0
      %v628 = vadd.f32 %v404, %v627
      %629 = vmatprep.mubr.bf16.mxu0 %v354
      %630 = vmatmul.mubr.bf16.gmra.mxu0 %v353
      %v631 = vpop.f32.mrf.mxu0
      %v632 = vadd.f32 %v400, %v631
      %v633 = vpop.f32.mrf.mxu0
      %v634 = vadd.f32 %v404, %v633
      %v635 = vpop.f32.mrf.mxu0
      %v636 = vadd.f32 %v400, %v635
      %v637 = vpop.f32.mrf.mxu0
      %v638 = vadd.f32 %v404, %v637
      %639 = vmatprep.mubr.bf16.mxu0 %v356
      %640 = vmatmul.mubr.bf16.gmra.mxu0 %v355
      %v641 = vpop.f32.mrf.mxu0
      %v642 = vadd.f32 %v400, %v641
      %v643 = vpop.f32.mrf.mxu0
      %v644 = vadd.f32 %v404, %v643
      %v645 = vpop.f32.mrf.mxu0
      %v646 = vadd.f32 %v400, %v645
      %v647 = vpop.f32.mrf.mxu0
      %v648 = vadd.f32 %v404, %v647
      %649 = vmatprep.mubr.bf16.mxu0 %v358
      %650 = vmatmul.mubr.bf16.gmra.mxu0 %v357
      %v651 = vpop.f32.mrf.mxu0
      %v652 = vadd.f32 %v400, %v651
      %v653 = vpop.f32.mrf.mxu0
      %v654 = vadd.f32 %v404, %v653
      %v655 = vpop.f32.mrf.mxu0
      %v656 = vadd.f32 %v400, %v655
      %v657 = vpop.f32.mrf.mxu0
      %v658 = vadd.f32 %v404, %v657
      %659 = vmatprep.mubr.bf16.mxu0 %v360
      %660 = vmatmul.mubr.bf16.gmra.mxu0 %v359
      %v661 = vpop.f32.mrf.mxu0
      %v662 = vadd.f32 %v400, %v661
      %v663 = vpop.f32.mrf.mxu0
      %v664 = vadd.f32 %v404, %v663
      %v665 = vpop.f32.mrf.mxu0
      %v666 = vadd.f32 %v400, %v665
      %v667 = vpop.f32.mrf.mxu0
      %v668 = vadd.f32 %v404, %v667
      %669 = vmatprep.mubr.bf16.mxu0 %v362
      %670 = vmatmul.mubr.bf16.gmra.mxu0 %v361
      %v671 = vpop.f32.mrf.mxu0
      %v672 = vadd.f32 %v400, %v671
      %v673 = vpop.f32.mrf.mxu0
      %v674 = vadd.f32 %v404, %v673
      %v675 = vpop.f32.mrf.mxu0
      %v676 = vadd.f32 %v400, %v675
      %v677 = vpop.f32.mrf.mxu0
      %v678 = vadd.f32 %v404, %v677
      %679 = vdwg.mxu0
      %v680 = vmul.f32 %v602, 3.0
      %v681 = vmul.f32 %v604, 3.0
      %v682 = vmul.f32 %v606, 3.0
      %v683 = vmul.f32 %v608, 3.0
      %v684 = vmul.f32 %v612, 3.0
      %v685 = vmul.f32 %v614, 3.0
      %v686 = vmul.f32 %v616, 3.0
      %v687 = vmul.f32 %v618, 3.0
      %v688 = vmul.f32 %v622, 3.0
      %v689 = vmul.f32 %v624, 3.0
      %v690 = vmul.f32 %v626, 3.0
      %v691 = vmul.f32 %v628, 3.0
      %v692 = vmul.f32 %v632, 3.0
      %v693 = vmul.f32 %v634, 3.0
      %v694 = vmul.f32 %v636, 3.0
      %v695 = vmul.f32 %v638, 3.0
      %v696 = vmul.f32 %v642, 3.0
      %v697 = vmul.f32 %v644, 3.0
      %v698 = vmul.f32 %v646, 3.0
      %v699 = vmul.f32 %v648, 3.0
      %v700 = vmul.f32 %v652, 3.0
      %v701 = vmul.f32 %v654, 3.0
      %v702 = vmul.f32 %v656, 3.0
      %v703 = vmul.f32 %v658, 3.0
      %v704 = vmul.f32 %v662, 3.0
      %v705 = vmul.f32 %v664, 3.0
      %v706 = vmul.f32 %v666, 3.0
      %v707 = vmul.f32 %v668, 3.0
      %v708 = vmul.f32 %v672, 3.0
      %v709 = vmul.f32 %v674, 3.0
      %v710 = vmul.f32 %v676, 3.0
      %v711 = vmul.f32 %v678, 3.0
      %v712 = vtanh.pop %v680
      %v713 = vtanh.pop %v681
      %v714 = vtanh.pop %v682
      %v715 = vtanh.pop %v683
      %v716 = vtanh.pop %v684
      %v717 = vtanh.pop %v685
      %v718 = vtanh.pop %v686
      %v719 = vtanh.pop %v687
      %v720 = vtanh.pop %v688
      %v721 = vtanh.pop %v689
      %v722 = vtanh.pop %v690
      %v723 = vtanh.pop %v691
      %v724 = vtanh.pop %v692
      %v725 = vtanh.pop %v693
      %v726 = vtanh.pop %v694
      %v727 = vtanh.pop %v695
      %v728 = vtanh.pop %v696
      %v729 = vtanh.pop %v697
      %v730 = vtanh.pop %v698
      %v731 = vtanh.pop %v699
      %v732 = vtanh.pop %v700
      %v733 = vtanh.pop %v701
      %v734 = vtanh.pop %v702
      %v735 = vtanh.pop %v703
      %v736 = vtanh.pop %v704
      %v737 = vtanh.pop %v705
      %v738 = vtanh.pop %v706
      %v739 = vtanh.pop %v707
      %v740 = vtanh.pop %v708
      %v741 = vtanh.pop %v709
      %v742 = vtanh.pop %v710
      %v743 = vtanh.pop %v711
      %744 = vst [vmem:[#allocation2] sm:$0xff] %v712
      %745 = vst [vmem:[#allocation2 + $0x8] sm:$0xff] %v713
      %746 = vst [vmem:[#allocation2 + $0x10] sm:$0xff] %v714
      %747 = vst [vmem:[#allocation2 + $0x18] sm:$0xff] %v715
      %748 = vst [vmem:[#allocation2 + $0x20] sm:$0xff] %v716
      %749 = vst [vmem:[#allocation2 + $0x28] sm:$0xff] %v717
      %750 = vst [vmem:[#allocation2 + $0x30] sm:$0xff] %v718
      %751 = vst [vmem:[#allocation2 + $0x38] sm:$0xff] %v719
      %752 = vst [vmem:[#allocation2 + $0x40] sm:$0xff] %v720
      %753 = vst [vmem:[#allocation2 + $0x48] sm:$0xff] %v721
      %754 = vst [vmem:[#allocation2 + $0x50] sm:$0xff] %v722
      %755 = vst [vmem:[#allocation2 + $0x58] sm:$0xff] %v723
      %756 = vst [vmem:[#allocation2 + $0x60] sm:$0xff] %v724
      %757 = vst [vmem:[#allocation2 + $0x68] sm:$0xff] %v725
      %758 = vst [vmem:[#allocation2 + $0x70] sm:$0xff] %v726
      %759 = vst [vmem:[#allocation2 + $0x78] sm:$0xff] %v727
      %760 = vst [vmem:[#allocation2 + $0x80] sm:$0xff] %v728
      %761 = vst [vmem:[#allocation2 + $0x88] sm:$0xff] %v729
      %762 = vst [vmem:[#allocation2 + $0x90] sm:$0xff] %v730
      %763 = vst [vmem:[#allocation2 + $0x98] sm:$0xff] %v731
      %764 = vst [vmem:[#allocation2 + $0xa0] sm:$0xff] %v732
      %765 = vst [vmem:[#allocation2 + $0xa8] sm:$0xff] %v733
      %766 = vst [vmem:[#allocation2 + $0xb0] sm:$0xff] %v734
      %767 = vst [vmem:[#allocation2 + $0xb8] sm:$0xff] %v735
      %768 = vst [vmem:[#allocation2 + $0xc0] sm:$0xff] %v736
      %769 = vst [vmem:[#allocation2 + $0xc8] sm:$0xff] %v737
      %770 = vst [vmem:[#allocation2 + $0xd0] sm:$0xff] %v738
      %771 = vst [vmem:[#allocation2 + $0xd8] sm:$0xff] %v739
      %772 = vst [vmem:[#allocation2 + $0xe0] sm:$0xff] %v740
      %773 = vst [vmem:[#allocation2 + $0xe8] sm:$0xff] %v741
      %774 = vst [vmem:[#allocation2 + $0xf0] sm:$0xff] %v742
      %775 = vst [vmem:[#allocation2 + $0xf8] sm:$0xff] %v743
      %v776 = vpack.c.bf16 %v714, %v712
      %v777 = vpack.c.bf16 %v715, %v713
      %v778 = vpack.c.bf16 %v718, %v716
      %v779 = vpack.c.bf16 %v719, %v717
      %v780 = vpack.c.bf16 %v722, %v720
      %v781 = vpack.c.bf16 %v723, %v721
      %v782 = vpack.c.bf16 %v726, %v724
      %v783 = vpack.c.bf16 %v727, %v725
      %v784 = vpack.c.bf16 %v730, %v728
      %v785 = vpack.c.bf16 %v731, %v729
      %v786 = vpack.c.bf16 %v734, %v732
      %v787 = vpack.c.bf16 %v735, %v733
      %v788 = vpack.c.bf16 %v738, %v736
      %v789 = vpack.c.bf16 %v739, %v737
      %v790 = vpack.c.bf16 %v742, %v740
      %v791 = vpack.c.bf16 %v743, %v741
      %v808 = vunpack.c.l.b16 %v776
      %v809 = vunpack.c.l.b16 %v777
      %v810 = vunpack.c.h.b16 %v776
      %v811 = vunpack.c.h.b16 %v777
      %v812 = vunpack.c.l.b16 %v778
      %v813 = vunpack.c.l.b16 %v779
      %v814 = vunpack.c.h.b16 %v778
      %v815 = vunpack.c.h.b16 %v779
      %v816 = vunpack.c.l.b16 %v780
      %v817 = vunpack.c.l.b16 %v781
      %v818 = vunpack.c.h.b16 %v780
      %v819 = vunpack.c.h.b16 %v781
      %v820 = vunpack.c.l.b16 %v782
      %v821 = vunpack.c.l.b16 %v783
      %v822 = vunpack.c.h.b16 %v782
      %v823 = vunpack.c.h.b16 %v783
      %v824 = vunpack.c.l.b16 %v784
      %v825 = vunpack.c.l.b16 %v785
      %v826 = vunpack.c.h.b16 %v784
      %v827 = vunpack.c.h.b16 %v785
      %v828 = vunpack.c.l.b16 %v786
      %v829 = vunpack.c.l.b16 %v787
      %v830 = vunpack.c.h.b16 %v786
      %v831 = vunpack.c.h.b16 %v787
      %v832 = vunpack.c.l.b16 %v788
      %v833 = vunpack.c.l.b16 %v789
      %v834 = vunpack.c.h.b16 %v788
      %v835 = vunpack.c.h.b16 %v789
      %v836 = vunpack.c.l.b16 %v790
      %v837 = vunpack.c.l.b16 %v791
      %v838 = vunpack.c.h.b16 %v790
      %v839 = vunpack.c.h.b16 %v791
      %v840 = vpack.c.b16 %v809, %v808
      %v841 = vpack.c.b16 %v811, %v810
      %v842 = vpack.c.b16 %v813, %v812
      %v843 = vpack.c.b16 %v815, %v814
      %v844 = vpack.c.b16 %v817, %v816
      %v845 = vpack.c.b16 %v819, %v818
      %v846 = vpack.c.b16 %v821, %v820
      %v847 = vpack.c.b16 %v823, %v822
      %v848 = vpack.c.b16 %v825, %v824
      %v849 = vpack.c.b16 %v827, %v826
      %v850 = vpack.c.b16 %v829, %v828
      %v851 = vpack.c.b16 %v831, %v830
      %v852 = vpack.c.b16 %v833, %v832
      %v853 = vpack.c.b16 %v835, %v834
      %v854 = vpack.c.b16 %v837, %v836
      %v855 = vpack.c.b16 %v839, %v838
      %872 = vst [vmem:[%s196] sm:$0xff] %v840
      %873 = vst [vmem:[%s196 + $0x8] sm:$0xff] %v841
      %874 = vst [vmem:[%s196 + $0x10] sm:$0xff] %v842
      %875 = vst [vmem:[%s196 + $0x18] sm:$0xff] %v843
      %876 = vst [vmem:[%s196 + $0x20] sm:$0xff] %v844
      %877 = vst [vmem:[%s196 + $0x28] sm:$0xff] %v845
      %878 = vst [vmem:[%s196 + $0x30] sm:$0xff] %v846
      %879 = vst [vmem:[%s196 + $0x38] sm:$0xff] %v847
      %880 = vst [vmem:[%s196 + $0x40] sm:$0xff] %v848
      %881 = vst [vmem:[%s196 + $0x48] sm:$0xff] %v849
      %882 = vst [vmem:[%s196 + $0x50] sm:$0xff] %v850
      %883 = vst [vmem:[%s196 + $0x58] sm:$0xff] %v851
      %884 = vst [vmem:[%s196 + $0x60] sm:$0xff] %v852
      %885 = vst [vmem:[%s196 + $0x68] sm:$0xff] %v853
      %886 = vst [vmem:[%s196 + $0x70] sm:$0xff] %v854
      %887 = vst [vmem:[%s196 + $0x78] sm:$0xff] %v855
      %v888 = vpack.c.b16 %v809, %v809
      %v889 = vpack.c.b16 %v811, %v811
      %v890 = vpack.c.b16 %v813, %v813
      %v891 = vpack.c.b16 %v815, %v815
      %v892 = vpack.c.b16 %v817, %v817
      %v893 = vpack.c.b16 %v819, %v819
      %v894 = vpack.c.b16 %v821, %v821
      %v895 = vpack.c.b16 %v823, %v823
      %v896 = vpack.c.b16 %v825, %v825
      %v897 = vpack.c.b16 %v827, %v827
      %v898 = vpack.c.b16 %v829, %v829
      %v899 = vpack.c.b16 %v831, %v831
      %v900 = vpack.c.b16 %v833, %v833
      %v901 = vpack.c.b16 %v835, %v835
      %v902 = vpack.c.b16 %v837, %v837
      %v903 = vpack.c.b16 %v839, %v839
      %920 = vst [vmem:[%s201] sm:$0xf] %v888
      %921 = vst [vmem:[%s201 + $0x8] sm:$0xf] %v889
      %922 = vst [vmem:[%s201 + $0x10] sm:$0xf] %v890
      %923 = vst [vmem:[%s201 + $0x18] sm:$0xf] %v891
      %924 = vst [vmem:[%s201 + $0x20] sm:$0xf] %v892
      %925 = vst [vmem:[%s201 + $0x28] sm:$0xf] %v893
      %926 = vst [vmem:[%s201 + $0x30] sm:$0xf] %v894
      %927 = vst [vmem:[%s201 + $0x38] sm:$0xf] %v895
      %928 = vst [vmem:[%s201 + $0x40] sm:$0xf] %v896
      %929 = vst [vmem:[%s201 + $0x48] sm:$0xf] %v897
      %930 = vst [vmem:[%s201 + $0x50] sm:$0xf] %v898
      %931 = vst [vmem:[%s201 + $0x58] sm:$0xf] %v899
      %932 = vst [vmem:[%s201 + $0x60] sm:$0xf] %v900
      %933 = vst [vmem:[%s201 + $0x68] sm:$0xf] %v901
      %934 = vst [vmem:[%s201 + $0x70] sm:$0xf] %v902
      %935 = vst [vmem:[%s201 + $0x78] sm:$0xf] %v903
      %v936 = vsub.f32 0.0, %v712
      %v937 = vsub.f32 0.0, %v714
      %v938 = vsub.f32 0.0, %v716
      %v939 = vsub.f32 0.0, %v718
      %v940 = vsub.f32 0.0, %v720
      %v941 = vsub.f32 0.0, %v722
      %v942 = vsub.f32 0.0, %v724
      %v943 = vsub.f32 0.0, %v726
      %v944 = vsub.f32 0.0, %v728
      %v945 = vsub.f32 0.0, %v730
      %v946 = vsub.f32 0.0, %v732
      %v947 = vsub.f32 0.0, %v734
      %v948 = vsub.f32 0.0, %v736
      %v949 = vsub.f32 0.0, %v738
      %v950 = vsub.f32 0.0, %v740
      %v951 = vsub.f32 0.0, %v742
      %v952 = vpack.c.bf16 %v937, %v936
      %v953 = vpack.c.bf16 %v939, %v938
      %v954 = vpack.c.bf16 %v941, %v940
      %v955 = vpack.c.bf16 %v943, %v942
      %v956 = vpack.c.bf16 %v945, %v944
      %v957 = vpack.c.bf16 %v947, %v946
      %v958 = vpack.c.bf16 %v949, %v948
      %v959 = vpack.c.bf16 %v951, %v950
      %v968 = vunpack.c.l.b16 %v952
      %v969 = vunpack.c.h.b16 %v952
      %v970 = vunpack.c.l.b16 %v953
      %v971 = vunpack.c.h.b16 %v953
      %v972 = vunpack.c.l.b16 %v954
      %v973 = vunpack.c.h.b16 %v954
      %v974 = vunpack.c.l.b16 %v955
      %v975 = vunpack.c.h.b16 %v955
      %v976 = vunpack.c.l.b16 %v956
      %v977 = vunpack.c.h.b16 %v956
      %v978 = vunpack.c.l.b16 %v957
      %v979 = vunpack.c.h.b16 %v957
      %v980 = vunpack.c.l.b16 %v958
      %v981 = vunpack.c.h.b16 %v958
      %v982 = vunpack.c.l.b16 %v959
      %v983 = vunpack.c.h.b16 %v959
      %v984 = vpack.c.b16 %v968, %v968
      %v985 = vpack.c.b16 %v969, %v969
      %v986 = vpack.c.b16 %v970, %v970
      %v987 = vpack.c.b16 %v971, %v971
      %v988 = vpack.c.b16 %v972, %v972
      %v989 = vpack.c.b16 %v973, %v973
      %v990 = vpack.c.b16 %v974, %v974
      %v991 = vpack.c.b16 %v975, %v975
      %v992 = vpack.c.b16 %v976, %v976
      %v993 = vpack.c.b16 %v977, %v977
      %v994 = vpack.c.b16 %v978, %v978
      %v995 = vpack.c.b16 %v979, %v979
      %v996 = vpack.c.b16 %v980, %v980
      %v997 = vpack.c.b16 %v981, %v981
      %v998 = vpack.c.b16 %v982, %v982
      %v999 = vpack.c.b16 %v983, %v983
      %1016 = vst [vmem:[%s201 + $0x4] sm:$0xf] %v984
      %1017 = vst [vmem:[%s201 + $0xc] sm:$0xf] %v985
      %1018 = vst [vmem:[%s201 + $0x14] sm:$0xf] %v986
      %1019 = vst [vmem:[%s201 + $0x1c] sm:$0xf] %v987
      %1020 = vst [vmem:[%s201 + $0x24] sm:$0xf] %v988
      %1021 = vst [vmem:[%s201 + $0x2c] sm:$0xf] %v989
      %1022 = vst [vmem:[%s201 + $0x34] sm:$0xf] %v990
      %1023 = vst [vmem:[%s201 + $0x3c] sm:$0xf] %v991
      %1024 = vst [vmem:[%s201 + $0x44] sm:$0xf] %v992
      %1025 = vst [vmem:[%s201 + $0x4c] sm:$0xf] %v993
      %1026 = vst [vmem:[%s201 + $0x54] sm:$0xf] %v994
      %1027 = vst [vmem:[%s201 + $0x5c] sm:$0xf] %v995
      %1028 = vst [vmem:[%s201 + $0x64] sm:$0xf] %v996
      %1029 = vst [vmem:[%s201 + $0x6c] sm:$0xf] %v997
      %1030 = vst [vmem:[%s201 + $0x74] sm:$0xf] %v998
      %1031 = vst [vmem:[%s201 + $0x7c] sm:$0xf] %v999
      %p1032 = scmp.lt.s32.totalorder %s16, 1
      %s1033 = scalar_select %p1032, %s16, 1
      %s1034 = smul.addr %s1033, 32
      %s1035 = smul.addr %s1034, 4
      %s1036 = scalar_lea.vmem %s3, %s1035
      %p1037 = scmp.lt.s32.totalorder %s16, 1
      %s1038 = scalar_select %p1037, %s16, 1
      %s1039 = smul.addr %s1038, 32
      %s1040 = smul.addr %s1039, 4
      %s1041 = scalar_lea.vmem %s4, %s1040
      // Predicated region
      $region67: #{_forward.2} parent=27 // pred_check
        %p1042 = pneg %p86
      $region68: #{_forward.2} parent=27 // pred_check_branch
        %1044 = sbr.rel (%p1042) target = $region70
      $region69: #{_forward.2} parent=27 // pred_region
        _
      $region70: #{_forward.2} parent=27 // pred_fallthru
        _
      // Predicated region
      $region71: #{_forward.2} parent=27 // pred_check
        %p1045 = pneg %p112
      $region72: #{_forward.2} parent=27 // pred_check_branch
        %1047 = sbr.rel (%p1045) target = $region74
      $region73: #{_forward.2} parent=27 // pred_region
        _
      $region74: #{_forward.2} parent=27 // pred_fallthru
        _
    $region28: #{_forward.2} parent=5 // pred_fallthru
      _
    %p1048 = scmp.le.s32.totalorder 2, %s11
    // Predicated region
    $region75: #{_forward.2} parent=5 // pred_check
      %p1049 = pneg %p1048
    $region76: #{_forward.2} parent=5 // pred_check_branch
      %1051 = sbr.rel (%p1049) target = $region78
    $region77: #{_forward.2} parent=5 // pred_region
      %s1052 = ssub.s32 %s11, 2
      // Predicated region
      $region79: #{_forward.2} parent=77 // pred_check
        %p1053 = pneg %p92
      $region80: #{_forward.2} parent=77 // pred_check_branch
        %1055 = sbr.rel (%p1053) target = $region82
      $region81: #{_forward.2} parent=77 // pred_region
        %p1056 = scmp.lt.s32.totalorder %s17, 1
        %s1057 = scalar_select %p1056, %s17, 1
        %s1058 = smul.addr %s1057, 32
        %s1059 = smul.addr %s1058, 4
        %s1060 = scalar_lea.vmem %s3, %s1059
      $region82: #{_forward.2} parent=77 // pred_fallthru
        _
      // Predicated region
      $region83: #{_forward.2} parent=77 // pred_check
        %p1061 = pneg %p118
      $region84: #{_forward.2} parent=77 // pred_check_branch
        %1063 = sbr.rel (%p1061) target = $region86
      $region85: #{_forward.2} parent=77 // pred_region
        %p1064 = scmp.lt.s32.totalorder %s17, 1
        %s1065 = scalar_select %p1064, %s17, 1
        %s1066 = smul.addr %s1065, 32
        %s1067 = smul.addr %s1066, 4
        %s1068 = scalar_lea.vmem %s4, %s1067
      $region86: #{_forward.2} parent=77 // pred_fallthru
        _
    $region78: #{_forward.2} parent=5 // pred_fallthru
      _
  $region6: #{_forward.2} parent=0 // loop_footer
    %s15 = sadd.s32 1, %s11
  $region7: #{_forward.2} parent=0 // loop_footer_branch
    %10 = sbr.rel target = $region3
  $region8: #{_forward.2} parent=0 // loop_exit
    _
  %1069 = vsyncmov [#allocation3]
  %s1070 = vpop.sfrf %1069
  %p1071 = scmp.eq.s32.totalorder %s1070, 0
  %p1072 = pneg %p1071
  %1074 = shalt.err (%p1072)

</llo_original>
